<compile_context>
chip_gen: v6e
topology: v6e:2x2x1
jax: 0.10.0
libtpu: 0.0.40
codegen_flags: <defaults>
</compile_context>

<pallas_src>
import functools

import jax
import jax.numpy as jnp
from jax.experimental import pallas as pl
from jax.experimental.pallas import tpu as pltpu

EMBEDDING_SIZE = 9
HIDDEN_SIZE = 100
_HIGH = jax.lax.Precision.HIGHEST  # reference only


# ----------------------------------------------------------------------------
# Glue: fundamental matrix from two 3x4 camera matrices (plain JAX, not hot).
# ----------------------------------------------------------------------------
def _skew(v):
    z = jnp.zeros((), v.dtype)
    return jnp.stack([
        jnp.stack([z, -v[2], v[1]]),
        jnp.stack([v[2], z, -v[0]]),
        jnp.stack([-v[1], v[0], z]),
    ])


def find_fundamental_mat(KRT, other_KRT):
    """F = [e']_x P2 P1^+  (F is invariant to the choice of right inverse of P1)."""
    def single(p1, p2):
        # Right null vector of p1 (3x4, full row rank) via signed 3x3 minors.
        minors = [p1[:, [j for j in range(4) if j != i]] for i in range(4)]
        center = jnp.stack(
            [((-1.0) ** i) * jnp.linalg.det(minors[i]) for i in range(4)])
        e2 = p2 @ center                                   # epipole in the second view
        p1_pinv = p1.T @ jnp.linalg.inv(p1 @ p1.T)         # Moore-Penrose (full row rank)
        return _skew(e2) @ p2 @ p1_pinv
    return jax.vmap(single)(KRT, other_KRT)


# ----------------------------------------------------------------------------
# Pallas kernels (the hot paths).
# ----------------------------------------------------------------------------
def mlp_fused_kernel(emb_ref, fc0w_ref, fc0b_ref, fc1w_ref, fc1b_ref, sharew_ref,
                     o_ref, h_ref):
    """h = relu(emb @ fc0) computed ONCE into a VMEM scratch (persists across grid
    steps); each grid step emits one lane-tile of fc1(h) + share_w (the fused weight)."""
    @pl.when(pl.program_id(0) == 0)
    def _():
        h = jnp.dot(emb_ref[...], fc0w_ref[...],
                    preferred_element_type=jnp.float32) + fc0b_ref[...]
        h_ref[...] = jnp.maximum(h, 0.0)

    w = jnp.dot(h_ref[...], fc1w_ref[...],
                preferred_element_type=jnp.float32) + fc1b_ref[...]
    o_ref[...] = (w + sharew_ref[...]).astype(o_ref.dtype)


def conv1x1_kernel(w_ref, bias_ref, x_ref, o_ref):
    """Fused dynamic+shared 1x1 conv: out = w_fused @ x + bias_fused.

    Block views: w (tb,C,C) bf16, bias (C,1) f32, x (tb,C,tile_hw) in its HBM dtype,
    out (tb,C,tile_hw).  x is cast in-kernel (VPU) -- no XLA prepass copy.  The
    contraction is over C only, so garbage in out-of-bounds spatial lanes of a ragged
    last tile is harmless (its output lanes are store-masked by Pallas).
    """
    x = x_ref[...].astype(w_ref.dtype)
    acc = jnp.einsum('bcd,bdm->bcm', w_ref[...], x,
                     preferred_element_type=jnp.float32)
    o_ref[...] = (acc + bias_ref[...][None]).astype(o_ref.dtype)


# ----------------------------------------------------------------------------
# Static (trace-time) tiling helpers.
# ----------------------------------------------------------------------------
def _largest_divisor_leq(n, cap):
    cap = max(1, min(n, cap))
    for t in range(cap, 0, -1):
        if n % t == 0:
            return t
    return 1


@functools.lru_cache(maxsize=None)
def _generation_budgets():
    """(conv working-set budget, scoped-VMEM limit) for the current TPU generation."""
    try:
        kind = jax.devices()[0].device_kind.lower()
    except Exception:  # pragma: no cover - defensive
        kind = ""
    if "v6" in kind:                        # v6e: 128 MiB VMEM; big tiles pay (>=512 -> 85%+ roofline)
        return 26 << 20, 64 << 20
    if "v7" in kind or "7x" in kind:        # v7x: 64 MiB VMEM per TC -> keep working set well under
        return 26 << 20, 32 << 20
    # v5e (16 MiB default scoped) and unknown generations: conservative.
    return 12 << 20, 32 << 20


# ----------------------------------------------------------------------------
# Wrapper
# ----------------------------------------------------------------------------
@functools.partial(jax.jit, static_argnames=("compute_dtype", "out_dtype"))
def meta_forward(KRT, other_KRT, x, params, *, compute_dtype=jnp.bfloat16,
                 out_dtype=None):
    fc0_w, fc0_b, fc1_w, fc1_b, meta_bias, share_w, share_b = params
    N, C, H, W = x.shape
    HW = H * W
    CC = C * C
    out_dtype = jnp.dtype(out_dtype) if out_dtype is not None else x.dtype
    budget_bytes, vmem_limit = _generation_budgets()

    # ---- glue: fundamental matrix (not a hot path) ---------------------------
    Fm = find_fundamental_mat(KRT, other_KRT)                       # (N, 3, 3)
    emb = Fm.reshape(N, EMBEDDING_SIZE).astype(jnp.float32)

    # ---- kernel 1: MLP -> per-sample weight, fused with the share weight -----
    # Tile CC with a multiple-of-128 tile; pl.cdiv + store masking handles any tail,
    # so fc1_w never lands as one oversized VMEM block even for non-128-multiple CC.
    tile_cc = CC if CC <= 1024 else 1024
    n_cc = pl.cdiv(CC, tile_cc)

    w_fused_flat = pl.pallas_call(
        mlp_fused_kernel,
        out_shape=jax.ShapeDtypeStruct((N, CC), compute_dtype),
        grid_spec=pltpu.PrefetchScalarGridSpec(
            num_scalar_prefetch=0,
            grid=(n_cc,),
            in_specs=[
                pl.BlockSpec((N, EMBEDDING_SIZE), lambda j: (0, 0)),          # emb
                pl.BlockSpec((EMBEDDING_SIZE, HIDDEN_SIZE), lambda j: (0, 0)),
                pl.BlockSpec((1, HIDDEN_SIZE), lambda j: (0, 0)),
                pl.BlockSpec((HIDDEN_SIZE, tile_cc), lambda j: (0, j)),       # fc1_w tile
                pl.BlockSpec((1, tile_cc), lambda j: (0, j)),                 # fc1_b tile
                pl.BlockSpec((1, tile_cc), lambda j: (0, j)),                 # share_w tile
            ],
            out_specs=pl.BlockSpec((N, tile_cc), lambda j: (0, j)),
            scratch_shapes=[pltpu.VMEM((N, HIDDEN_SIZE), jnp.float32)],       # h (hoisted fc0)
        ),
        compiler_params=pltpu.CompilerParams(
            dimension_semantics=("arbitrary",),        # scratch carried across CC tiles
            vmem_limit_bytes=vmem_limit),
    )(emb, fc0_w, fc0_b, fc1_w, fc1_b,
      share_w.reshape(1, CC).astype(jnp.float32))
    w_fused = w_fused_flat.reshape(N, C, C)                         # free reshape

    # ---- kernel 2: fused per-sample 1x1 conv ---------------------------------
    bias_fused = (meta_bias + share_b).reshape(C, 1).astype(jnp.float32)
    xf = x.reshape(N, C, HW)              # layout-preserving; NO cast / NO pad copies

    x_isz = jnp.dtype(x.dtype).itemsize
    o_isz = jnp.dtype(out_dtype).itemsize
    w_isz = jnp.dtype(compute_dtype).itemsize

    def conv_vmem(tb_, tile_):
        # x + out streams double-buffered, f32 einsum intermediate (single),
        # double-buffered weight block, bias.
        stream = tb_ * C * tile_ * (2 * x_isz + 2 * o_isz + 4)
        fixed = 2 * tb_ * C * C * w_isz + 2 * C * 4
        return stream + fixed

    hw_cap = min(2048, max(128, pl.cdiv(HW, 128) * 128))
    tb = _largest_divisor_leq(N, 8)                    # samples per grid step
    while True:
        tile_hw = hw_cap
        while tile_hw > 128 and conv_vmem(tb, tile_hw) > budget_bytes:
            tile_hw -= 128
        if conv_vmem(tb, tile_hw) <= budget_bytes or tb == 1:
            break
        tb = _largest_divisor_leq(N, tb - 1)

    n_s = pl.cdiv(HW, tile_hw)
    if (N // tb) * n_s < 2 and tb > 1:                 # give megacore >=2 parallel slabs
        tb = _largest_divisor_leq(N, max(1, N // 2))

    out = pl.pallas_call(
        conv1x1_kernel,
        out_shape=jax.ShapeDtypeStruct((N, C, HW), out_dtype),
        grid_spec=pltpu.PrefetchScalarGridSpec(
            num_scalar_prefetch=0,
            grid=(N // tb, pl.cdiv(HW, tile_hw)),
            in_specs=[
                pl.BlockSpec((tb, C, C), lambda b, s: (b, 0, 0)),        # weight: constant over s
                pl.BlockSpec((C, 1), lambda b, s: (0, 0)),               # fused bias
                pl.BlockSpec((tb, C, tile_hw), lambda b, s: (b, 0, s)),  # x tile (ragged tail OK)
            ],
            out_specs=pl.BlockSpec((tb, C, tile_hw), lambda b, s: (b, 0, s)),
        ),
        compiler_params=pltpu.CompilerParams(
            dimension_semantics=("parallel", "parallel"),
            vmem_limit_bytes=vmem_limit),
    )(w_fused, bias_fused, xf)

    return out.reshape(N, C, H, W)                     # free reshape


# ----------------------------------------------------------------------------
# Deterministic parameter init (mimics nn.Linear / nn.Conv2d uniform bounds).
# ----------------------------------------------------------------------------
def init_params(key, C):
    ks = jax.random.split(key, 6)
    b0 = 1.0 / jnp.sqrt(EMBEDDING_SIZE)
    fc0_w = jax.random.uniform(ks[0], (EMBEDDING_SIZE, HIDDEN_SIZE), jnp.float32, -b0, b0)
    fc0_b = jax.random.uniform(ks[1], (1, HIDDEN_SIZE), jnp.float32, -b0, b0)
    b1 = 1.0 / jnp.sqrt(HIDDEN_SIZE)
    fc1_w = jax.random.uniform(ks[2], (HIDDEN_SIZE, C * C), jnp.float32, -b1, b1)
    fc1_b = jax.random.uniform(ks[3], (1, C * C), jnp.float32, -b1, b1)
    meta_bias = jnp.zeros((C,), jnp.float32)                 # self.bias = torch.zeros(C)
    bs = 1.0 / jnp.sqrt(C)
    share_w = jax.random.uniform(ks[4], (C, C), jnp.float32, -bs, bs)  # Conv2d(C,C,1) weight
    share_b = jax.random.uniform(ks[5], (C,), jnp.float32, -bs, bs)
    return (fc0_w, fc0_b, fc1_w, fc1_b, meta_bias, share_w, share_b)


# ----------------------------------------------------------------------------
# Pure-JAX full-precision reference (sanity check only).
# ----------------------------------------------------------------------------
def meta_forward_ref(KRT, other_KRT, x, params):
    fc0_w, fc0_b, fc1_w, fc1_b, meta_bias, share_w, share_b = params
    N, C, H, W = x.shape
    emb = find_fundamental_mat(KRT, other_KRT).reshape(N, EMBEDDING_SIZE).astype(jnp.float32)
    h = jnp.maximum(jnp.dot(emb, fc0_w, precision=_HIGH) + fc0_b, 0.0)
    w_dyn = (jnp.dot(h, fc1_w, precision=_HIGH) + fc1_b).reshape(N, C, C)
    xf = x.reshape(N, C, H * W).astype(jnp.float32)
    dyn = jnp.einsum('ncd,ndm->ncm', w_dyn, xf, precision=_HIGH) + meta_bias[None, :, None]
    shr = jnp.einsum('cd,ndm->ncm', share_w, xf, precision=_HIGH) + share_b[None, :, None]
    return (dyn + shr).reshape(N, C, H, W).astype(x.dtype)


if __name__ == "__main__":
    key = jax.random.PRNGKey(0)
    kp, kk1, kk2, kx = jax.random.split(key, 4)

    N, C, H, W = 2, 4, 16, 16
    params = init_params(kp, C)
    KRT = jax.random.normal(kk1, (N, 3, 4), jnp.float32)
    other_KRT = jax.random.normal(kk2, (N, 3, 4), jnp.float32)
    x = jax.random.normal(kx, (N, C, H, W), jnp.float32)

    out = meta_forward(KRT, other_KRT, x, params)
    out = jax.block_until_ready(out)

    ref = meta_forward_ref(KRT, other_KRT, x, params)
    # bf16 MXU passes + bf16 fused weight -> loosened tolerance vs the f32 reference.
    if not jnp.allclose(out, ref, rtol=5e-2, atol=5e-2):
        err = float(jnp.max(jnp.abs(out - ref)))
        raise AssertionError(f"Pallas output does not match JAX reference (max abs err {err})")

    print("KERNEL_OK")
</pallas_src>

<mosaic_0001>
module attributes {stable_mosaic.version = 11 : i64} {
  func.func @mlp_fused_kernel(%arg0: i32, %arg1: memref<2x9xf32, #tpu.memory_space<vmem>>, %arg2: memref<9x100xf32, #tpu.memory_space<vmem>>, %arg3: memref<1x100xf32, #tpu.memory_space<vmem>>, %arg4: memref<100x16xf32, #tpu.memory_space<vmem>>, %arg5: memref<1x16xf32, #tpu.memory_space<vmem>>, %arg6: memref<1x16xf32, #tpu.memory_space<vmem>>, %arg7: memref<2x16xbf16, #tpu.memory_space<vmem>>, %arg8: memref<2x100xf32, #tpu.memory_space<vmem>>) attributes {dimension_semantics = [#tpu.dimension_semantics<arbitrary>], iteration_bounds = array<i64: 1>, scalar_prefetch = 0 : i64, scratch_operands = 1 : i64, tpu.core_type = #tpu.core_type<tc>, window_params = [{pipeline_mode = #tpu.pipeline_mode<synchronous>, transform_indices = @transform_0, window_bounds = array<i64: 2, 9>}, {pipeline_mode = #tpu.pipeline_mode<synchronous>, transform_indices = @transform_1, window_bounds = array<i64: 9, 100>}, {pipeline_mode = #tpu.pipeline_mode<synchronous>, transform_indices = @transform_2, window_bounds = array<i64: 1, 100>}, {transform_indices = @transform_3, window_bounds = array<i64: 100, 16>}, {transform_indices = @transform_4, window_bounds = array<i64: 1, 16>}, {transform_indices = @transform_5, window_bounds = array<i64: 1, 16>}, {transform_indices = @transform_6, window_bounds = array<i64: 2, 16>}]} {
    %c0_i32 = arith.constant 0 : i32
    %0 = arith.cmpi eq, %arg0, %c0_i32 : i32
    %1 = arith.extui %0 : i1 to i32
    %c0_i32_0 = arith.constant 0 : i32
    %2 = arith.cmpi ne, %1, %c0_i32_0 : i32
    scf.if %2 {
      %c0_10 = arith.constant 0 : index
      %c0_11 = arith.constant 0 : index
      %14 = vector.load %arg1[%c0_10, %c0_11] : memref<2x9xf32, #tpu.memory_space<vmem>>, vector<2x9xf32>
      %c0_12 = arith.constant 0 : index
      %c0_13 = arith.constant 0 : index
      %15 = vector.load %arg2[%c0_12, %c0_13] : memref<9x100xf32, #tpu.memory_space<vmem>>, vector<9x100xf32>
      %cst_14 = arith.constant dense<0.000000e+00> : vector<2x100xf32>
      %16 = tpu.matmul %14, %15, %cst_14 {dimension_numbers = #tpu.dot_dimension_numbers<[1], [0], [0], [1], [0, 0, 1, 1], [], []>} : vector<2x9xf32>, vector<9x100xf32>, vector<2x100xf32> -> vector<2x100xf32>
      %c0_15 = arith.constant 0 : index
      %c0_16 = arith.constant 0 : index
      %17 = vector.load %arg3[%c0_15, %c0_16] : memref<1x100xf32, #tpu.memory_space<vmem>>, vector<1x100xf32>
      %18 = vector.broadcast %17 : vector<1x100xf32> to vector<2x100xf32>
      %19 = arith.addf %16, %18 : vector<2x100xf32>
      %cst_17 = arith.constant 0.000000e+00 : f32
      %20 = vector.broadcast %cst_17 : f32 to vector<2x100xf32>
      %21 = arith.maximumf %19, %20 : vector<2x100xf32>
      %c0_18 = arith.constant 0 : index
      %c0_19 = arith.constant 0 : index
      %22 = vector.load %arg8[%c0_18, %c0_19] : memref<2x100xf32, #tpu.memory_space<vmem>>, vector<2x100xf32>
      tpu.vector_store %arg8[%c0_18, %c0_19], %21 {strides = array<i32>} : memref<2x100xf32, #tpu.memory_space<vmem>>, vector<2x100xf32>,
    } else {
    }
    %c0 = arith.constant 0 : index
    %c0_1 = arith.constant 0 : index
    %3 = vector.load %arg8[%c0, %c0_1] : memref<2x100xf32, #tpu.memory_space<vmem>>, vector<2x100xf32>
    %c0_2 = arith.constant 0 : index
    %c0_3 = arith.constant 0 : index
    %4 = vector.load %arg4[%c0_2, %c0_3] : memref<100x16xf32, #tpu.memory_space<vmem>>, vector<100x16xf32>
    %cst = arith.constant dense<0.000000e+00> : vector<2x16xf32>
    %5 = tpu.matmul %3, %4, %cst {dimension_numbers = #tpu.dot_dimension_numbers<[1], [0], [0], [1], [0, 0, 1, 1], [], []>} : vector<2x100xf32>, vector<100x16xf32>, vector<2x16xf32> -> vector<2x16xf32>
    %c0_4 = arith.constant 0 : index
    %c0_5 = arith.constant 0 : index
    %6 = vector.load %arg5[%c0_4, %c0_5] : memref<1x16xf32, #tpu.memory_space<vmem>>, vector<1x16xf32>
    %7 = vector.broadcast %6 : vector<1x16xf32> to vector<2x16xf32>
    %8 = arith.addf %5, %7 : vector<2x16xf32>
    %c0_6 = arith.constant 0 : index
    %c0_7 = arith.constant 0 : index
    %9 = vector.load %arg6[%c0_6, %c0_7] : memref<1x16xf32, #tpu.memory_space<vmem>>, vector<1x16xf32>
    %10 = vector.broadcast %9 : vector<1x16xf32> to vector<2x16xf32>
    %11 = arith.addf %8, %10 : vector<2x16xf32>
    %12 = arith.truncf %11 : vector<2x16xf32> to vector<2x16xbf16>
    %c0_8 = arith.constant 0 : index
    %c0_9 = arith.constant 0 : index
    %13 = vector.load %arg7[%c0_8, %c0_9] : memref<2x16xbf16, #tpu.memory_space<vmem>>, vector<2x16xbf16>
    tpu.vector_store %arg7[%c0_8, %c0_9], %12 {strides = array<i32>} : memref<2x16xbf16, #tpu.memory_space<vmem>>, vector<2x16xbf16>,
    return
  }
  func.func @transform_0(%arg0: i32) -> (i32, i32) {
    %c0_i32 = arith.constant 0 : i32
    %c0_i32_0 = arith.constant 0 : i32
    %c0_i32_1 = arith.constant 0 : i32
    return %c0_i32, %c0_i32_0 : i32, i32
  }
  func.func @transform_1(%arg0: i32) -> (i32, i32) {
    %c0_i32 = arith.constant 0 : i32
    %c0_i32_0 = arith.constant 0 : i32
    %c0_i32_1 = arith.constant 0 : i32
    return %c0_i32, %c0_i32_0 : i32, i32
  }
  func.func @transform_2(%arg0: i32) -> (i32, i32) {
    %c0_i32 = arith.constant 0 : i32
    %c0_i32_0 = arith.constant 0 : i32
    %c0_i32_1 = arith.constant 0 : i32
    return %c0_i32, %c0_i32_0 : i32, i32
  }
  func.func @transform_3(%arg0: i32) -> (i32, i32) {
    %c0_i32 = arith.constant 0 : i32
    %c0_i32_0 = arith.constant 0 : i32
    return %c0_i32, %arg0 : i32, i32
  }
  func.func @transform_4(%arg0: i32) -> (i32, i32) {
    %c0_i32 = arith.constant 0 : i32
    %c0_i32_0 = arith.constant 0 : i32
    return %c0_i32, %arg0 : i32, i32
  }
  func.func @transform_5(%arg0: i32) -> (i32, i32) {
    %c0_i32 = arith.constant 0 : i32
    %c0_i32_0 = arith.constant 0 : i32
    return %c0_i32, %arg0 : i32, i32
  }
  func.func @transform_6(%arg0: i32) -> (i32, i32) {
    %c0_i32 = arith.constant 0 : i32
    %c0_i32_0 = arith.constant 0 : i32
    return %c0_i32, %arg0 : i32, i32
  }
}

module attributes {stable_mosaic.version = 11 : i64} {
  func.func @conv1x1_kernel(%arg0: i32, %arg1: i32, %arg2: memref<1x4x4xbf16, #tpu.memory_space<vmem>>, %arg3: memref<4x1xf32, #tpu.memory_space<vmem>>, %arg4: memref<1x4x256xf32, #tpu.memory_space<vmem>>, %arg5: memref<1x4x256xf32, #tpu.memory_space<vmem>>) attributes {dimension_semantics = [#tpu.dimension_semantics<parallel>, #tpu.dimension_semantics<parallel>], iteration_bounds = array<i64: 2, 1>, scalar_prefetch = 0 : i64, scratch_operands = 0 : i64, tpu.core_type = #tpu.core_type<tc>, window_params = [{transform_indices = @transform_0, window_bounds = array<i64: 1, 4, 4>}, {pipeline_mode = #tpu.pipeline_mode<synchronous>, transform_indices = @transform_1, window_bounds = array<i64: 4, 1>}, {transform_indices = @transform_2, window_bounds = array<i64: 1, 4, 256>}, {transform_indices = @transform_3, window_bounds = array<i64: 1, 4, 256>}]} {
    %c0 = arith.constant 0 : index
    %c0_0 = arith.constant 0 : index
    %c0_1 = arith.constant 0 : index
    %0 = vector.load %arg4[%c0, %c0_0, %c0_1] : memref<1x4x256xf32, #tpu.memory_space<vmem>>, vector<1x4x256xf32>
    %1 = arith.truncf %0 : vector<1x4x256xf32> to vector<1x4x256xbf16>
    %c0_2 = arith.constant 0 : index
    %c0_3 = arith.constant 0 : index
    %c0_4 = arith.constant 0 : index
    %2 = vector.load %arg2[%c0_2, %c0_3, %c0_4] : memref<1x4x4xbf16, #tpu.memory_space<vmem>>, vector<1x4x4xbf16>
    "tpu.trace_start"() <{level = 10 : i32, message = "bcd,bdm->bcm"}> : () -> ()
    %cst = arith.constant dense<0.000000e+00> : vector<1x4x256xf32>
    %3 = tpu.matmul %2, %1, %cst {dimension_numbers = #tpu.dot_dimension_numbers<[2], [1], [1], [2], [0, 0, 0, 1, 1, 2], [0], [0]>} : vector<1x4x4xbf16>, vector<1x4x256xbf16>, vector<1x4x256xf32> -> vector<1x4x256xf32>
    "tpu.trace_stop"() : () -> ()
    %c0_5 = arith.constant 0 : index
    %c0_6 = arith.constant 0 : index
    %4 = vector.load %arg3[%c0_5, %c0_6] : memref<4x1xf32, #tpu.memory_space<vmem>>, vector<4x1xf32>
    %5 = vector.shape_cast %4 : vector<4x1xf32> to vector<1x4x1xf32>
    %6 = vector.broadcast %5 : vector<1x4x1xf32> to vector<1x4x256xf32>
    %7 = arith.addf %3, %6 : vector<1x4x256xf32>
    %c0_7 = arith.constant 0 : index
    %c0_8 = arith.constant 0 : index
    %c0_9 = arith.constant 0 : index
    %8 = vector.load %arg5[%c0_7, %c0_8, %c0_9] : memref<1x4x256xf32, #tpu.memory_space<vmem>>, vector<1x4x256xf32>
    tpu.vector_store %arg5[%c0_7, %c0_8, %c0_9], %7 {strides = array<i32>} : memref<1x4x256xf32, #tpu.memory_space<vmem>>, vector<1x4x256xf32>,
    return
  }
  func.func @transform_0(%arg0: i32, %arg1: i32) -> (i32, i32, i32) {
    %c0_i32 = arith.constant 0 : i32
    %c0_i32_0 = arith.constant 0 : i32
    %c0_i32_1 = arith.constant 0 : i32
    return %arg0, %c0_i32, %c0_i32_0 : i32, i32, i32
  }
  func.func @transform_1(%arg0: i32, %arg1: i32) -> (i32, i32) {
    %c0_i32 = arith.constant 0 : i32
    %c0_i32_0 = arith.constant 0 : i32
    %c0_i32_1 = arith.constant 0 : i32
    return %c0_i32, %c0_i32_0 : i32, i32
  }
  func.func @transform_2(%arg0: i32, %arg1: i32) -> (i32, i32, i32) {
    %c0_i32 = arith.constant 0 : i32
    %c0_i32_0 = arith.constant 0 : i32
    return %arg0, %c0_i32, %arg1 : i32, i32, i32
  }
  func.func @transform_3(%arg0: i32, %arg1: i32) -> (i32, i32, i32) {
    %c0_i32 = arith.constant 0 : i32
    %c0_i32_0 = arith.constant 0 : i32
    return %arg0, %c0_i32, %arg1 : i32, i32, i32
  }
}

</mosaic_0001>

<llo_original>
// kernel: custom-call.11
$region0: #{custom-call.11}
  %s0 = inlined_call_operand.vmem [shape: f32[2,3,3], index: 0, kind: input, shape index: {}]
  %s1 = inlined_call_operand.vmem [shape: f32[2,3,3], index: 1, kind: output, shape index: {0}]
  %s2 = inlined_call_operand.hbm [shape: s32[2,3], index: 2, kind: output, shape index: {1}]
  %s3 = inlined_call_operand.vmem [shape: s32[2,3], index: 3, kind: output, shape index: {2}]
  %4 = xla_tuple %s1, %s2, %s3
  $region1: #{custom-call.11} parent=0
    #allocation0 [shape = 'u8[4096]{0}', space=vmem, size = 0x1000, scoped, tag = 'operand span for operand 0']
    #allocation1 [shape = 'u8[4096]{0}', space=vmem, size = 0x1000, scoped, tag = 'packed  for operand 0']
    #allocation2 [shape = 'u8[4096]{0}', space=vmem, size = 0x1000, scoped, tag = 'operand span for operand 1']
    #allocation3 [shape = 'u8[4096]{0}', space=vmem, size = 0x1000, scoped, tag = 'packed  for operand 1']
    #allocation4 [shape = 'u8[4096]{0}', space=vmem, size = 0x1000, scoped, tag = 'operand span for operand 2']
    #allocation5 [shape = 'u8[2048]{0}', space=vmem, size = 0x800, scoped, tag = 'packed  for operand 2']
    #allocation6 [shape = 's32[2]{0}', space=sflag, size = 0x8, scoped, tag = 'scoped memory for custom-call.11']
    #allocation7 [shape = 'u8[4096]{0}', space=vmem, size = 0x1000, scoped, tag = 'operand span for operand 3']
    #allocation8 [shape = 'u8[2048]{0}', space=vmem, size = 0x800, scoped, tag = 'packed  for operand 3']
    %5 = vsyncpa [#allocation6], 0
    %s6 = scalar_lea.sflag [#allocation6], 1
    %7 = vsyncpa %s6, 0
    loop: start=0, step=1, limit=4
    $region2: #{custom-call.11} parent=1 // loop_pre_header
      _
    $region3: #{custom-call.11} parent=1 // loop_header
      %s9 = sphi 0, %s13
      %p10 = scmp.ge.s32.totalorder %s9, 4
      %s21 = sphi 0, %s23
      %s24 = sphi 0, %s21
      %s25 = sphi 0, %s24
      %s41 = sphi 0, %s25
      %s49 = sphi 0, %s51
      %s52 = sphi 0, %s49
      %s53 = sphi 0, %s52
      %s69 = sphi 0, %s53
    $region4: #{custom-call.11} parent=1 // loop_header_branch
      %12 = sbr.rel (%p10) target = $region8
    $region5: #{custom-call.11} parent=1 // loop_body
      %s14 = ssub.s32 %s9, 1
      %s15 = ssub.s32 %s9, 2
      %s16 = sadd.s32 %s9, 1
      %s17 = sshrl.u32 %s9, 3
      %s18 = sshrl.u32 %s16, 3
      %s19 = ssub.s32 %s17, %s18
      %p20 = scmp.eq.s32.totalorder %s19, 0
      %s22 = sadd.s32 %s21, 1
      %s23 = scalar_select %p20, %s21, %s22
      %p26 = pneg %p20
      %p27 = scmp.eq.s32.totalorder %s9, 1
      %p28 = por %p26, %p27
      %p29 = scmp.ne.s32.totalorder %s21, %s24
      %p30 = scmp.eq.s32.totalorder %s9, 0
      %p31 = por %p29, %p30
      %p32 = scmp.ne.s32.totalorder %s21, %s24
      %p33 = scmp.eq.s32.totalorder %s14, 1
      %p34 = por %p32, %p33
      %p35 = scmp.ne.s32.totalorder %s24, %s25
      %p36 = scmp.eq.s32.totalorder %s14, 0
      %p37 = por %p35, %p36
      %p38 = scmp.ne.s32.totalorder %s24, %s25
      %p39 = scmp.eq.s32.totalorder %s15, 1
      %p40 = por %p38, %p39
      %p42 = scmp.ne.s32.totalorder %s25, %s41
      %p43 = scmp.eq.s32.totalorder %s15, 0
      %p44 = por %p42, %p43
      %s45 = sshrl.u32 %s9, 3
      %s46 = sshrl.u32 %s16, 3
      %s47 = ssub.s32 %s45, %s46
      %p48 = scmp.eq.s32.totalorder %s47, 0
      %s50 = sadd.s32 %s49, 1
      %s51 = scalar_select %p48, %s49, %s50
      %p54 = pneg %p48
      %p55 = scmp.eq.s32.totalorder %s9, 1
      %p56 = por %p54, %p55
      %p57 = scmp.ne.s32.totalorder %s49, %s52
      %p58 = scmp.eq.s32.totalorder %s9, 0
      %p59 = por %p57, %p58
      %p60 = scmp.ne.s32.totalorder %s49, %s52
      %p61 = scmp.eq.s32.totalorder %s14, 1
      %p62 = por %p60, %p61
      %p63 = scmp.ne.s32.totalorder %s52, %s53
      %p64 = scmp.eq.s32.totalorder %s14, 0
      %p65 = por %p63, %p64
      %p66 = scmp.ne.s32.totalorder %s52, %s53
      %p67 = scmp.eq.s32.totalorder %s15, 1
      %p68 = por %p66, %p67
      %p70 = scmp.ne.s32.totalorder %s53, %s69
      %p71 = scmp.eq.s32.totalorder %s15, 0
      %p72 = por %p70, %p71
      %p73 = scmp.le.s32.totalorder 1, %s9
      %p74 = scmp.lt.s32.totalorder %s9, 3
      %p75 = pnand %p73, %p74
      %p76 = pneg %p75
      // Predicated region
      $region9: #{custom-call.11} parent=5 // pred_check
        _
      $region10: #{custom-call.11} parent=5 // pred_check_branch
        %78 = sbr.rel (%p75) target = $region12
      $region11: #{custom-call.11} parent=5 // pred_region
        %s79 = ssub.s32 %s9, 1
      $region12: #{custom-call.11} parent=5 // pred_fallthru
        _
      %p80 = scmp.lt.s32.totalorder %s9, 2
      // Predicated region
      $region13: #{custom-call.11} parent=5 // pred_check
        %p81 = pneg %p80
      $region14: #{custom-call.11} parent=5 // pred_check_branch
        %83 = sbr.rel (%p81) target = $region16
      $region15: #{custom-call.11} parent=5 // pred_region
        %s84 = sand.u32 %s9, 1
        %s85 = sand.u32 %s9, 1
        %s86 = smul.addr %s85, 4
        %s87 = scalar_lea.vmem [#allocation1], %s86
        %s88 = smul.addr %s9, 4
        %s89 = scalar_lea.vmem %s0, %s88
        // Predicated region
        $region17: #{custom-call.11} parent=15 // pred_check
          _
        $region18: #{custom-call.11} parent=15 // pred_check_branch
          %91 = sbr.rel (0) target = $region20
        $region19: #{custom-call.11} parent=15 // pred_region
          // Predicated region
          $region21: #{custom-call.11} parent=19 // pred_check
            _
          $region22: #{custom-call.11} parent=19 // pred_check_branch
            %93 = sbr.rel target = $region24
          $region23: #{custom-call.11} parent=19 // pred_region
            // Predicated region
            $region36: #{custom-call.11} parent=23 // pred_check
              _
            $region37: #{custom-call.11} parent=23 // pred_check_branch
              %109 = sbr.rel (0) target = $region39
            $region38: #{custom-call.11} parent=23 // pred_region
              %s111 = ssub.s32 16, 1
              loop: start=0, step=1, limit=1
              $region40: #{custom-call.11} parent=38 // loop_pre_header
                _
              $region41: #{custom-call.11} parent=38 // loop_header
                %s113 = sphi 0, %s117
                %p114 = scmp.ge.s32.totalorder %s113, 1
                %s118 = sphi %s89, %s89
                %s119 = sphi %s87, %s87
              $region42: #{custom-call.11} parent=38 // loop_header_branch
                %116 = sbr.rel (%p114) target = $region46
              $region43: #{custom-call.11} parent=38 // loop_body
                %v120 = vld [vmem:[%s118] sm:%s111]
                %121 = vst [vmem:[%s119] sm:%s111] %v120
              $region44: #{custom-call.11} parent=38 // loop_footer
                %s117 = sadd.s32 1, %s113
              $region45: #{custom-call.11} parent=38 // loop_footer_branch
                %112 = sbr.rel target = $region41
              $region46: #{custom-call.11} parent=38 // loop_exit
                _
            $region39: #{custom-call.11} parent=23 // pred_fallthru
              _
          $region24: #{custom-call.11} parent=19 // pred_fallthru
            _
          // Predicated region
          $region25: #{custom-call.11} parent=19 // pred_check
            _
          $region26: #{custom-call.11} parent=19 // pred_check_branch
            %95 = sbr.rel (0) target = $region28
          $region27: #{custom-call.11} parent=19 // pred_region
            %s97 = ssub.s32 16, 1
            loop: start=0, step=1, limit=1
            $region29: #{custom-call.11} parent=27 // loop_pre_header
              _
            $region30: #{custom-call.11} parent=27 // loop_header
              %s99 = sphi 0, %s103
              %p100 = scmp.ge.s32.totalorder %s99, 1
              %s104 = sphi %s89, %s89
              %s105 = sphi %s87, %s87
            $region31: #{custom-call.11} parent=27 // loop_header_branch
              %102 = sbr.rel (%p100) target = $region35
            $region32: #{custom-call.11} parent=27 // loop_body
              %v106 = vld [vmem:[%s104] sm:%s97]
              %107 = vst [vmem:[%s105] sm:%s97] %v106
            $region33: #{custom-call.11} parent=27 // loop_footer
              %s103 = sadd.s32 1, %s99
            $region34: #{custom-call.11} parent=27 // loop_footer_branch
              %98 = sbr.rel target = $region30
            $region35: #{custom-call.11} parent=27 // loop_exit
              _
          $region28: #{custom-call.11} parent=19 // pred_fallthru
            _
        $region20: #{custom-call.11} parent=15 // pred_fallthru
          _
        %122 = vnop
      $region16: #{custom-call.11} parent=5 // pred_fallthru
        _
      %p123 = scmp.le.s32.totalorder 1, %s9
      %p124 = scmp.lt.s32.totalorder %s9, 3
      %p125 = pnand %p123, %p124
      %p126 = pneg %p125
      // Predicated region
      $region47: #{custom-call.11} parent=5 // pred_check
        _
      $region48: #{custom-call.11} parent=5 // pred_check_branch
        %128 = sbr.rel (%p125) target = $region50
      $region49: #{custom-call.11} parent=5 // pred_region
        #allocation9 [shape = 's32[3,128]{1,0}', space=vmem, size = 0x1000, scoped, tag = 'scratch for permutations']
        %s129 = ssub.s32 %s9, 1
        %s130 = sand.u32 %s14, 1
        %s131 = sand.u32 %s14, 1
        %s132 = smul.addr %s131, 4
        %s133 = scalar_lea.vmem [#allocation1], %s132
        %s134 = sand.u32 %s14, 1
        %s135 = sand.u32 %s14, 1
        %s136 = smul.addr %s135, 4
        %s137 = scalar_lea.vmem [#allocation1], %s136
        %s138 = sand.u32 %s14, 1
        %s139 = sand.u32 %s14, 1
        %s140 = smul.addr %s139, 4
        %s141 = scalar_lea.vmem [#allocation3], %s140
        %p142 = pneg %p37
        %p143 = pneg %p34
        %s144 = sand.u32 %s24, 1
        %s145 = scalar_lea.sflag [#allocation6], %s144
        %s146 = sand.u32 %s24, 1
        %s147 = smul.addr %s146, 2
        %s148 = scalar_lea.vmem [#allocation5], %s147
        %p149 = pneg %p65
        %p150 = pneg %p62
        %s151 = sand.u32 %s52, 1
        %s152 = sand.u32 %s52, 1
        %s153 = smul.addr %s152, 2
        %s154 = scalar_lea.vmem [#allocation8], %s153
        %s156 = sshll.u32 1, 4
        %s157 = ssub.s32 %s156, 1
        %v158 = vld [vmem:[%s137] sm:%s157]
        %159 = vst [vmem:[#allocation0] sm:%s157] %v158
        %s160 = sshrl.u32 %s14, 3
        %s161 = sshrl.u32 %s14, 3
        %v162 = vld [vmem:[#allocation0] sm:$0xff]
        %163 = vst [vmem:[#allocation2] sm:$0xff] %v162
        %s164 = sand.u32 %s14, 7
        %s165 = scalar_lea.vmem [#allocation4], %s164
        %s166 = sand.u32 %s14, 7
        %s167 = scalar_lea.vmem [#allocation7], %s166
        %168 = vst [vmem:[%s165] sm:$0x1] 0
        %v169 = vlaneseq
        %v170 = vshrl.u32 %v169, 7
        %v171 = vmov %v170
        %173 = vst [vmem:[#allocation9] sm:$0xff] %v171
        loop: start=0, step=1, limit=3
        $region52: #{custom-call.11} parent=49 // loop_pre_header
          _
        $region53: #{custom-call.11} parent=49 // loop_header
          %s175 = sphi 0, %s179
          %p176 = scmp.ge.s32.totalorder %s175, 3
        $region54: #{custom-call.11} parent=49 // loop_header_branch
          %178 = sbr.rel (%p176) target = $region58
        $region55: #{custom-call.11} parent=49 // loop_body
          %v180 = vstv %s175
          %v181 = vlaneseq
          %v182 = vshrl.u32 %v181, 7
          %v183 = vmov %v182
          %v184 = vld [vmem:[#allocation2] sm:$0xff]
          %v185 = vand.u32 2147483647, %v184
          %v187 = vstv %s175
          %vm188 = vcmp.ge.s32.totalorder %v183, %v187
          %vm189 = vcmp.lt.s32.totalorder %v183, 3
          %vm190 = vmand %vm188, %vm189
          %vm191 = vcmp.lt.f32.partialorder -inf, %v185
          %vm192 = vmand %vm190, %vm191
          %v193 = vsel %vm192, %v183, %v180
          %v194 = vsel %vm192, %v185, -inf
          %v195 = vrot.slane %v194, 1
          %v196 = vrot.slane %v193, 1
          %vm197 = vcmp.ge.f32.partialorder %v195, %v194
          %v198 = vsel %vm197, %v195, %v194
          %v199 = vsel %vm197, %v196, %v193
          %v200 = vrot.slane %v195, 1
          %v201 = vrot.slane %v196, 1
          %vm202 = vcmp.ge.f32.partialorder %v200, %v198
          %v203 = vsel %vm202, %v200, %v198
          %v204 = vsel %vm202, %v201, %v199
          %v205 = vrot.slane %v200, 1
          %v206 = vrot.slane %v201, 1
          %vm207 = vcmp.ge.f32.partialorder %v205, %v203
          %v208 = vsel %vm207, %v205, %v203
          %v209 = vsel %vm207, %v206, %v204
          %v210 = vrot.slane %v205, 1
          %v211 = vrot.slane %v206, 1
          %vm212 = vcmp.ge.f32.partialorder %v210, %v208
          %v213 = vsel %vm212, %v210, %v208
          %v214 = vsel %vm212, %v211, %v209
          %v215 = vrot.slane %v210, 1
          %v216 = vrot.slane %v211, 1
          %vm217 = vcmp.ge.f32.partialorder %v215, %v213
          %v218 = vsel %vm217, %v215, %v213
          %v219 = vsel %vm217, %v216, %v214
          %v220 = vrot.slane %v215, 1
          %v221 = vrot.slane %v216, 1
          %vm222 = vcmp.ge.f32.partialorder %v220, %v218
          %v223 = vsel %vm222, %v220, %v218
          %v224 = vsel %vm222, %v221, %v219
          %v225 = vrot.slane %v220, 1
          %v226 = vrot.slane %v221, 1
          %vm227 = vcmp.ge.f32.partialorder %v225, %v223
          %v228 = vsel %vm227, %v225, %v223
          %v229 = vsel %vm227, %v226, %v224
          %s230 = ssub.s32 128, %s175
          %231 = vrot.lane.b32.xlu0 %v229, %s230
          %v232 = vpop.permute.xlu0 %231
          %s233 = vtos %v232
          %v234 = vstv %s175
          %v235 = vlaneseq
          %v236 = vand.u32 %v235, 127
          %vm237 = vcmp.eq.s32.totalorder %v236, %v234
          %v238 = vstv %s233
          %v239 = vld [vmem:[%s165] ss:$0 sm:$0xff]
          %v240 = vsel %vm237, %v238, %v239
          %241 = vst [vmem:[%s165] sm:$0x1] %v240
          %s242 = scalar_lea.vmem [#allocation2], %s175
          %s243 = scalar_lea.vmem [#allocation2], %s233
          %v244 = vld [vmem:[%s242] ss:$0 sm:$0xff]
          %v245 = vld [vmem:[%s243] ss:$0 sm:$0xff]
          %246 = vst [vmem:[%s243] sm:$0x1] %v244
          %247 = vst [vmem:[%s242] sm:$0x1] %v245
          %s248 = scalar_lea.vmem [#allocation9], %s175
          %s249 = scalar_lea.vmem [#allocation9], %s233
          %v250 = vld [vmem:[%s248] ss:$0 sm:$0xff]
          %v251 = vld [vmem:[%s249] ss:$0 sm:$0xff]
          %252 = vst [vmem:[%s249] sm:$0x1] %v250
          %253 = vst [vmem:[%s248] sm:$0x1] %v251
          %vm254 = vcmp.ne.f32.partialorder %v245, 0.0
          %vm255 = vmand %vm237, %vm254
          %v256 = vsel %vm255, %v245, 1.0
          %v257 = vlaneseq
          %v258 = vand.u32 %v257, 127
          %v259 = vstv %s175
          %vm260 = vcmp.gt.s32.totalorder %v258, %v259
          %v261 = vsel %vm260, %v245, 0.0
          %v262 = vlaneseq
          %v263 = vshrl.u32 %v262, 7
          %v264 = vmov %v263
          %v265 = vld [vmem:[#allocation2] sm:$0xff]
          %v267 = vstv %s175
          %vm268 = vcmp.gt.s32.totalorder %v264, %v267
          %v269 = vsel %vm268, %v256, 1.0
          %v270 = vrcp.pop %v269
          %v271 = vmul.f32 %v265, %v270
          %vm272 = vmand %vm268, %vm237
          %v273 = vsel %vm272, %v271, 0.0
          %274 = vadd.xlane.f32.xlu0 %v273
          %v275 = vpop.xlane.xlu0 %274
          %v276 = vmul.f32 %v275, %v261
          %v277 = vsub.f32 %v271, %v276
          %278 = vst [vmem:[#allocation2] sm:$0xff] %v277
        $region56: #{custom-call.11} parent=49 // loop_footer
          %s179 = sadd.s32 1, %s175
        $region57: #{custom-call.11} parent=49 // loop_footer_branch
          %174 = sbr.rel target = $region53
        $region58: #{custom-call.11} parent=49 // loop_exit
          _
        %v279 = vld [vmem:[#allocation9] sm:$0xff]
        %s280 = scalar_lea.vmem [#allocation9], 8
        %s281 = scalar_lea.vmem [#allocation9], 16
        %s282 = scalar_lea.vmem [#allocation9], 24
        %s283 = scalar_lea.vmem [#allocation9], 32
        %s284 = scalar_lea.vmem [#allocation9], 40
        %s285 = scalar_lea.vmem [#allocation9], 48
        %s286 = scalar_lea.vmem [#allocation9], 56
        %s287 = scalar_lea.vmem [#allocation9], 64
        %s288 = scalar_lea.vmem [#allocation9], 72
        %s289 = scalar_lea.vmem [#allocation9], 80
        %s290 = scalar_lea.vmem [#allocation9], 88
        %s291 = scalar_lea.vmem [#allocation9], 96
        %s292 = scalar_lea.vmem [#allocation9], 104
        %s293 = scalar_lea.vmem [#allocation9], 112
        %s294 = scalar_lea.vmem [#allocation9], 120
        %295 = vxpose.xlu0.b32.start [1/16] %v279, 128
        %296 = vxpose.xlu0.b32.cont [2/16] 0, 128
        %297 = vxpose.xlu0.b32.cont [3/16] 0, 128
        %298 = vxpose.xlu0.b32.cont [4/16] 0, 128
        %299 = vxpose.xlu0.b32.cont [5/16] 0, 128
        %300 = vxpose.xlu0.b32.cont [6/16] 0, 128
        %301 = vxpose.xlu0.b32.cont [7/16] 0, 128
        %302 = vxpose.xlu0.b32.cont [8/16] 0, 128
        %303 = vxpose.xlu0.b32.cont [9/16] 0, 128
        %304 = vxpose.xlu0.b32.cont [10/16] 0, 128
        %305 = vxpose.xlu0.b32.cont [11/16] 0, 128
        %306 = vxpose.xlu0.b32.cont [12/16] 0, 128
        %307 = vxpose.xlu0.b32.cont [13/16] 0, 128
        %308 = vxpose.xlu0.b32.cont [14/16] 0, 128
        %309 = vxpose.xlu0.b32.cont [15/16] 0, 128
        %310 = vxpose.xlu0.b32.end [16/16] 0, 128
        %v311 = vpop.trf.xlu0
        %v312 = vpop.trf.xlu0
        %v313 = vpop.trf.xlu0
        %v314 = vpop.trf.xlu0
        %v315 = vpop.trf.xlu0
        %v316 = vpop.trf.xlu0
        %v317 = vpop.trf.xlu0
        %v318 = vpop.trf.xlu0
        %v319 = vpop.trf.xlu0
        %v320 = vpop.trf.xlu0
        %v321 = vpop.trf.xlu0
        %v322 = vpop.trf.xlu0
        %v323 = vpop.trf.xlu0
        %v324 = vpop.trf.xlu0
        %v325 = vpop.trf.xlu0
        %v326 = vpop.trf.xlu0
        %327 = vst [vmem:[%s167] sm:$0x1] %v311
        %s329 = sshll.u32 1, 4
        %s330 = ssub.s32 %s329, 1
        %v332 = vld [vmem:[#allocation2] sm:%s330]
        %s333 = sshll.u32 1, 4
        %s334 = ssub.s32 %s333, 1
        %335 = vst [vmem:[%s141] sm:%s334] %v332
        %s337 = sshll.u32 1, 2
        %s338 = ssub.s32 %s337, 1
        %v340 = vld [vmem:[#allocation4] sm:%s338]
        %s341 = sshll.u32 1, 2
        %s342 = ssub.s32 %s341, 1
        %343 = vst [vmem:[%s148] sm:%s342] %v340
        %s345 = sshll.u32 1, 2
        %s346 = ssub.s32 %s345, 1
        %v348 = vld [vmem:[#allocation7] sm:%s346]
        %s349 = sshll.u32 1, 2
        %s350 = ssub.s32 %s349, 1
        %351 = vst [vmem:[%s154] sm:%s350] %v348
        %s352 = sand.u32 %s14, 1
        %s353 = sand.u32 %s14, 1
        %s354 = smul.addr %s353, 4
        %s355 = scalar_lea.vmem [#allocation3], %s354
        %s356 = sand.u32 %s24, 1
        %s357 = scalar_lea.sflag [#allocation6], %s356
        %s358 = sand.u32 %s24, 1
        %s359 = smul.addr %s358, 2
        %s360 = scalar_lea.vmem [#allocation5], %s359
        %s361 = sand.u32 %s52, 1
        %s362 = sand.u32 %s52, 1
        %s363 = smul.addr %s362, 2
        %s364 = scalar_lea.vmem [#allocation8], %s363
        %s365 = smul.addr %s14, 4
        %s366 = scalar_lea.vmem %s1, %s365
        // Predicated region
        $region59: #{custom-call.11} parent=49 // pred_check
          _
        $region60: #{custom-call.11} parent=49 // pred_check_branch
          %368 = sbr.rel (0) target = $region62
        $region61: #{custom-call.11} parent=49 // pred_region
          // Predicated region
          $region63: #{custom-call.11} parent=61 // pred_check
            _
          $region64: #{custom-call.11} parent=61 // pred_check_branch
            %370 = sbr.rel target = $region66
          $region65: #{custom-call.11} parent=61 // pred_region
            // Predicated region
            $region78: #{custom-call.11} parent=65 // pred_check
              _
            $region79: #{custom-call.11} parent=65 // pred_check_branch
              %386 = sbr.rel (0) target = $region81
            $region80: #{custom-call.11} parent=65 // pred_region
              %s388 = ssub.s32 16, 1
              loop: start=0, step=1, limit=1
              $region82: #{custom-call.11} parent=80 // loop_pre_header
                _
              $region83: #{custom-call.11} parent=80 // loop_header
                %s390 = sphi 0, %s394
                %p391 = scmp.ge.s32.totalorder %s390, 1
                %s395 = sphi %s355, %s355
                %s396 = sphi %s366, %s366
              $region84: #{custom-call.11} parent=80 // loop_header_branch
                %393 = sbr.rel (%p391) target = $region88
              $region85: #{custom-call.11} parent=80 // loop_body
                %v397 = vld [vmem:[%s395] sm:%s388]
                %398 = vst [vmem:[%s396] sm:%s388] %v397
              $region86: #{custom-call.11} parent=80 // loop_footer
                %s394 = sadd.s32 1, %s390
              $region87: #{custom-call.11} parent=80 // loop_footer_branch
                %389 = sbr.rel target = $region83
              $region88: #{custom-call.11} parent=80 // loop_exit
                _
            $region81: #{custom-call.11} parent=65 // pred_fallthru
              _
          $region66: #{custom-call.11} parent=61 // pred_fallthru
            _
          // Predicated region
          $region67: #{custom-call.11} parent=61 // pred_check
            _
          $region68: #{custom-call.11} parent=61 // pred_check_branch
            %372 = sbr.rel (0) target = $region70
          $region69: #{custom-call.11} parent=61 // pred_region
            %s374 = ssub.s32 16, 1
            loop: start=0, step=1, limit=1
            $region71: #{custom-call.11} parent=69 // loop_pre_header
              _
            $region72: #{custom-call.11} parent=69 // loop_header
              %s376 = sphi 0, %s380
              %p377 = scmp.ge.s32.totalorder %s376, 1
              %s381 = sphi %s355, %s355
              %s382 = sphi %s366, %s366
            $region73: #{custom-call.11} parent=69 // loop_header_branch
              %379 = sbr.rel (%p377) target = $region77
            $region74: #{custom-call.11} parent=69 // loop_body
              %v383 = vld [vmem:[%s381] sm:%s374]
              %384 = vst [vmem:[%s382] sm:%s374] %v383
            $region75: #{custom-call.11} parent=69 // loop_footer
              %s380 = sadd.s32 1, %s376
            $region76: #{custom-call.11} parent=69 // loop_footer_branch
              %375 = sbr.rel target = $region72
            $region77: #{custom-call.11} parent=69 // loop_exit
              _
          $region70: #{custom-call.11} parent=61 // pred_fallthru
            _
        $region62: #{custom-call.11} parent=49 // pred_fallthru
          _
        %399 = vnop
        // Predicated region
        $region89: #{custom-call.11} parent=49 // pred_check
          %p400 = pneg %p34
        $region90: #{custom-call.11} parent=49 // pred_check_branch
          %402 = sbr.rel (%p400) target = $region92
        $region91: #{custom-call.11} parent=49 // pred_region
          %s403 = sshrl.u32 %s14, 3
          %s405 = ssub.s32 32, 32
          %406 = vsyncadd %s357, %s405
          %s407 = smul.addr %s403, 32
          %s408 = scalar_lea.hbm %s2, %s407
          %s410 = sshll.u32 %s360, 4
          %s411 = int_to_ptr.vmem [resolvable:$true] %s410
          %413 = dma.vmem_to_hbm [thread:$0]  %s411, 32, %s408, %s357
        $region92: #{custom-call.11} parent=49 // pred_fallthru
          _
        // Predicated region
        $region93: #{custom-call.11} parent=49 // pred_check
          %p414 = pneg %p62
        $region94: #{custom-call.11} parent=49 // pred_check_branch
          %416 = sbr.rel (%p414) target = $region96
        $region95: #{custom-call.11} parent=49 // pred_region
          %s417 = sshrl.u32 %s14, 3
          %s418 = smul.addr %s417, 2
          %s419 = scalar_lea.vmem %s3, %s418
          // Predicated region
          $region97: #{custom-call.11} parent=95 // pred_check
            _
          $region98: #{custom-call.11} parent=95 // pred_check_branch
            %421 = sbr.rel (0) target = $region100
          $region99: #{custom-call.11} parent=95 // pred_region
            // Predicated region
            $region101: #{custom-call.11} parent=99 // pred_check
              _
            $region102: #{custom-call.11} parent=99 // pred_check_branch
              %423 = sbr.rel target = $region104
            $region103: #{custom-call.11} parent=99 // pred_region
              // Predicated region
              $region116: #{custom-call.11} parent=103 // pred_check
                _
              $region117: #{custom-call.11} parent=103 // pred_check_branch
                %439 = sbr.rel (0) target = $region119
              $region118: #{custom-call.11} parent=103 // pred_region
                %s441 = ssub.s32 4, 1
                loop: start=0, step=1, limit=1
                $region120: #{custom-call.11} parent=118 // loop_pre_header
                  _
                $region121: #{custom-call.11} parent=118 // loop_header
                  %s443 = sphi 0, %s447
                  %p444 = scmp.ge.s32.totalorder %s443, 1
                  %s448 = sphi %s364, %s364
                  %s449 = sphi %s419, %s419
                $region122: #{custom-call.11} parent=118 // loop_header_branch
                  %446 = sbr.rel (%p444) target = $region126
                $region123: #{custom-call.11} parent=118 // loop_body
                  %v450 = vld [vmem:[%s448] sm:%s441]
                  %451 = vst [vmem:[%s449] sm:%s441] %v450
                $region124: #{custom-call.11} parent=118 // loop_footer
                  %s447 = sadd.s32 1, %s443
                $region125: #{custom-call.11} parent=118 // loop_footer_branch
                  %442 = sbr.rel target = $region121
                $region126: #{custom-call.11} parent=118 // loop_exit
                  _
              $region119: #{custom-call.11} parent=103 // pred_fallthru
                _
            $region104: #{custom-call.11} parent=99 // pred_fallthru
              _
            // Predicated region
            $region105: #{custom-call.11} parent=99 // pred_check
              _
            $region106: #{custom-call.11} parent=99 // pred_check_branch
              %425 = sbr.rel (0) target = $region108
            $region107: #{custom-call.11} parent=99 // pred_region
              %s427 = ssub.s32 4, 1
              loop: start=0, step=1, limit=1
              $region109: #{custom-call.11} parent=107 // loop_pre_header
                _
              $region110: #{custom-call.11} parent=107 // loop_header
                %s429 = sphi 0, %s433
                %p430 = scmp.ge.s32.totalorder %s429, 1
                %s434 = sphi %s364, %s364
                %s435 = sphi %s419, %s419
              $region111: #{custom-call.11} parent=107 // loop_header_branch
                %432 = sbr.rel (%p430) target = $region115
              $region112: #{custom-call.11} parent=107 // loop_body
                %v436 = vld [vmem:[%s434] sm:%s427]
                %437 = vst [vmem:[%s435] sm:%s427] %v436
              $region113: #{custom-call.11} parent=107 // loop_footer
                %s433 = sadd.s32 1, %s429
              $region114: #{custom-call.11} parent=107 // loop_footer_branch
                %428 = sbr.rel target = $region110
              $region115: #{custom-call.11} parent=107 // loop_exit
                _
            $region108: #{custom-call.11} parent=99 // pred_fallthru
              _
          $region100: #{custom-call.11} parent=95 // pred_fallthru
            _
          %452 = vnop
        $region96: #{custom-call.11} parent=49 // pred_fallthru
          _
      $region50: #{custom-call.11} parent=5 // pred_fallthru
        _
      %p453 = scmp.le.s32.totalorder 2, %s9
      // Predicated region
      $region127: #{custom-call.11} parent=5 // pred_check
        %p454 = pneg %p453
      $region128: #{custom-call.11} parent=5 // pred_check_branch
        %456 = sbr.rel (%p454) target = $region130
      $region129: #{custom-call.11} parent=5 // pred_region
        %s457 = ssub.s32 %s9, 2
        %s458 = sand.u32 %s15, 1
        %s459 = sand.u32 %s15, 1
        %s460 = smul.addr %s459, 4
        %s461 = scalar_lea.vmem [#allocation3], %s460
        // Predicated region
        $region131: #{custom-call.11} parent=129 // pred_check
          %p462 = pneg %p40
        $region132: #{custom-call.11} parent=129 // pred_check_branch
          %464 = sbr.rel (%p462) target = $region134
        $region133: #{custom-call.11} parent=129 // pred_region
          %s465 = sand.u32 %s25, 1
          %s466 = scalar_lea.sflag [#allocation6], %s465
          %s467 = sand.u32 %s25, 1
          %s468 = smul.addr %s467, 2
          %s469 = scalar_lea.vmem [#allocation5], %s468
          %470 = dma.done %s466, 32
        $region134: #{custom-call.11} parent=129 // pred_fallthru
          _
        // Predicated region
        $region135: #{custom-call.11} parent=129 // pred_check
          %p471 = pneg %p68
        $region136: #{custom-call.11} parent=129 // pred_check_branch
          %473 = sbr.rel (%p471) target = $region138
        $region137: #{custom-call.11} parent=129 // pred_region
          %s474 = sand.u32 %s53, 1
          %s475 = sand.u32 %s53, 1
          %s476 = smul.addr %s475, 2
          %s477 = scalar_lea.vmem [#allocation8], %s476
        $region138: #{custom-call.11} parent=129 // pred_fallthru
          _
      $region130: #{custom-call.11} parent=5 // pred_fallthru
        _
    $region6: #{custom-call.11} parent=1 // loop_footer
      %s13 = sadd.s32 1, %s9
    $region7: #{custom-call.11} parent=1 // loop_footer_branch
      %8 = sbr.rel target = $region3
    $region8: #{custom-call.11} parent=1 // loop_exit
      _
    %478 = vsyncpa [#allocation6], 1
    %s479 = scalar_lea.sflag [#allocation6], 1
    %480 = vsyncpa %s479, 1

// kernel: custom-call.12
$region0: #{custom-call.12}
  %s0 = inlined_call_operand.vmem [shape: f32[2,1,3,3], index: 0, kind: input, shape index: {}]
  %s1 = inlined_call_operand.vmem [shape: f32[2,1,3,3], index: 1, kind: output, shape index: {}]
  $region1: #{custom-call.12} parent=0
    #allocation0 [shape = 'u8[4096]{0}', space=vmem, size = 0x1000, scoped, tag = 'operand span for operand 0']
    #allocation1 [shape = 'u8[4096]{0}', space=vmem, size = 0x1000, scoped, tag = 'packed  for operand 0']
    #allocation2 [shape = 'u8[4096]{0}', space=vmem, size = 0x1000, scoped, tag = 'operand span for operand 1']
    #allocation3 [shape = 'u8[4096]{0}', space=vmem, size = 0x1000, scoped, tag = 'packed  for operand 1']
    loop: start=0, step=1, limit=4
    $region2: #{custom-call.12} parent=1 // loop_pre_header
      _
    $region3: #{custom-call.12} parent=1 // loop_header
      %s3 = sphi 0, %s7
      %p4 = scmp.ge.s32.totalorder %s3, 4
      %s10 = sphi 0, %s36
      %s11 = sphi 0, %s32
      %s12 = sphi 0, %s28
      %s13 = sphi 0, %s24
      %s14 = sphi 0, %s10
      %s15 = sphi 0, %s11
      %s16 = sphi 0, %s12
      %s17 = sphi 0, %s13
      %s18 = sphi 0, %s14
      %s19 = sphi 0, %s15
      %s20 = sphi 0, %s16
      %s21 = sphi 0, %s17
    $region4: #{custom-call.12} parent=1 // loop_header_branch
      %6 = sbr.rel (%p4) target = $region8
    $region5: #{custom-call.12} parent=1 // loop_body
      %s8 = ssub.s32 %s3, 1
      %s9 = ssub.s32 %s3, 2
      %s22 = sadd.s32 1, %s13
      %p23 = scmp.ge.s32.totalorder %s22, 1
      %s24 = scalar_select %p23, 0, %s22
      %s25 = sadd.s32 1, %s12
      %s26 = scalar_select %p23, %s25, %s12
      %p27 = scmp.ge.s32.totalorder %s26, 1
      %s28 = scalar_select %p27, 0, %s26
      %s29 = sadd.s32 1, %s11
      %s30 = scalar_select %p27, %s29, %s11
      %p31 = scmp.ge.s32.totalorder %s30, 1
      %s32 = scalar_select %p31, 0, %s30
      %s33 = sadd.s32 1, %s10
      %s34 = scalar_select %p31, %s33, %s10
      %p35 = scmp.ge.s32.totalorder %s34, 2
      %s36 = scalar_select %p35, 0, %s34
      %p37 = scmp.le.s32.totalorder 1, %s3
      %p38 = scmp.lt.s32.totalorder %s3, 3
      %p39 = pnand %p37, %p38
      %p40 = pneg %p39
      // Predicated region
      $region9: #{custom-call.12} parent=5 // pred_check
        _
      $region10: #{custom-call.12} parent=5 // pred_check_branch
        %42 = sbr.rel (%p39) target = $region12
      $region11: #{custom-call.12} parent=5 // pred_region
        %s43 = ssub.s32 %s3, 1
      $region12: #{custom-call.12} parent=5 // pred_fallthru
        _
      %p44 = scmp.lt.s32.totalorder %s3, 2
      // Predicated region
      $region13: #{custom-call.12} parent=5 // pred_check
        %p45 = pneg %p44
      $region14: #{custom-call.12} parent=5 // pred_check_branch
        %47 = sbr.rel (%p45) target = $region16
      $region15: #{custom-call.12} parent=5 // pred_region
        %s48 = sand.u32 %s3, 1
        %s49 = sand.u32 %s3, 1
        %s50 = smul.addr %s49, 4
        %s51 = scalar_lea.vmem [#allocation1], %s50
        %s52 = sadd.s32 %s13, %s12
        %s53 = sadd.s32 %s52, %s11
        %s54 = sadd.s32 %s53, %s10
        %s55 = smul.addr %s54, 4
        %s56 = scalar_lea.vmem %s0, %s55
        // Predicated region
        $region17: #{custom-call.12} parent=15 // pred_check
          _
        $region18: #{custom-call.12} parent=15 // pred_check_branch
          %58 = sbr.rel (0) target = $region20
        $region19: #{custom-call.12} parent=15 // pred_region
          // Predicated region
          $region21: #{custom-call.12} parent=19 // pred_check
            _
          $region22: #{custom-call.12} parent=19 // pred_check_branch
            %60 = sbr.rel target = $region24
          $region23: #{custom-call.12} parent=19 // pred_region
            // Predicated region
            $region36: #{custom-call.12} parent=23 // pred_check
              _
            $region37: #{custom-call.12} parent=23 // pred_check_branch
              %76 = sbr.rel (0) target = $region39
            $region38: #{custom-call.12} parent=23 // pred_region
              %s78 = ssub.s32 16, 1
              loop: start=0, step=1, limit=1
              $region40: #{custom-call.12} parent=38 // loop_pre_header
                _
              $region41: #{custom-call.12} parent=38 // loop_header
                %s80 = sphi 0, %s84
                %p81 = scmp.ge.s32.totalorder %s80, 1
                %s85 = sphi %s56, %s56
                %s86 = sphi %s51, %s51
              $region42: #{custom-call.12} parent=38 // loop_header_branch
                %83 = sbr.rel (%p81) target = $region46
              $region43: #{custom-call.12} parent=38 // loop_body
                %v87 = vld [vmem:[%s85] sm:%s78]
                %88 = vst [vmem:[%s86] sm:%s78] %v87
              $region44: #{custom-call.12} parent=38 // loop_footer
                %s84 = sadd.s32 1, %s80
              $region45: #{custom-call.12} parent=38 // loop_footer_branch
                %79 = sbr.rel target = $region41
              $region46: #{custom-call.12} parent=38 // loop_exit
                _
            $region39: #{custom-call.12} parent=23 // pred_fallthru
              _
          $region24: #{custom-call.12} parent=19 // pred_fallthru
            _
          // Predicated region
          $region25: #{custom-call.12} parent=19 // pred_check
            _
          $region26: #{custom-call.12} parent=19 // pred_check_branch
            %62 = sbr.rel (0) target = $region28
          $region27: #{custom-call.12} parent=19 // pred_region
            %s64 = ssub.s32 16, 1
            loop: start=0, step=1, limit=1
            $region29: #{custom-call.12} parent=27 // loop_pre_header
              _
            $region30: #{custom-call.12} parent=27 // loop_header
              %s66 = sphi 0, %s70
              %p67 = scmp.ge.s32.totalorder %s66, 1
              %s71 = sphi %s56, %s56
              %s72 = sphi %s51, %s51
            $region31: #{custom-call.12} parent=27 // loop_header_branch
              %69 = sbr.rel (%p67) target = $region35
            $region32: #{custom-call.12} parent=27 // loop_body
              %v73 = vld [vmem:[%s71] sm:%s64]
              %74 = vst [vmem:[%s72] sm:%s64] %v73
            $region33: #{custom-call.12} parent=27 // loop_footer
              %s70 = sadd.s32 1, %s66
            $region34: #{custom-call.12} parent=27 // loop_footer_branch
              %65 = sbr.rel target = $region30
            $region35: #{custom-call.12} parent=27 // loop_exit
              _
          $region28: #{custom-call.12} parent=19 // pred_fallthru
            _
        $region20: #{custom-call.12} parent=15 // pred_fallthru
          _
        %89 = vnop
      $region16: #{custom-call.12} parent=5 // pred_fallthru
        _
      %p90 = scmp.le.s32.totalorder 1, %s3
      %p91 = scmp.lt.s32.totalorder %s3, 3
      %p92 = pnand %p90, %p91
      %p93 = pneg %p92
      // Predicated region
      $region47: #{custom-call.12} parent=5 // pred_check
        _
      $region48: #{custom-call.12} parent=5 // pred_check_branch
        %95 = sbr.rel (%p92) target = $region50
      $region49: #{custom-call.12} parent=5 // pred_region
        #allocation4 [shape = 'f32[3,3]{1,0}', space=vmem, size = 0x1000, scoped, tag = 'rescaled input a']
        %s96 = ssub.s32 %s3, 1
        %s97 = sand.u32 %s8, 1
        %s98 = sand.u32 %s8, 1
        %s99 = smul.addr %s98, 4
        %s100 = scalar_lea.vmem [#allocation1], %s99
        %s101 = sand.u32 %s8, 1
        %s102 = sand.u32 %s8, 1
        %s103 = smul.addr %s102, 4
        %s104 = scalar_lea.vmem [#allocation1], %s103
        %s105 = sand.u32 %s8, 1
        %s106 = sand.u32 %s8, 1
        %s107 = smul.addr %s106, 4
        %s108 = scalar_lea.vmem [#allocation3], %s107
        %s110 = sshll.u32 1, 4
        %s111 = ssub.s32 %s110, 1
        %v112 = vld [vmem:[%s104] sm:%s111]
        %113 = vst [vmem:[#allocation0] sm:%s111] %v112
        %v114 = vlaneseq
        %v115 = vand.u32 %v114, 127
        %vm116 = vcmp.lt.s32.totalorder %v115, 3
        %v117 = vlaneseq
        %v118 = vshrl.u32 %v117, 7
        %vm120 = vcmp.eq.s32.totalorder %v118, %v115
        %v121 = vld [vmem:[#allocation0] sm:$0xff]
        %v122 = vsel %vm120, %v121, 0.0
        %123 = vadd.xlane.f32.xlu0 %v122
        %v124 = vpop.xlane.xlu0 %123
        %vm125 = vcmp.le.s32.totalorder %v118, %v115
        %vm126 = vmand %vm125, %vm116
        %v127 = vsel %vm126, %v121, 0.0
        %v128 = vrcp.pop %v124
        %v129 = vmul.f32 %v127, %v128
        %130 = vst [vmem:[#allocation4] sm:$0xff] %v129
        %v131 = vlaneseq
        %v132 = vand.u32 %v131, 127
        %v133 = vlaneseq
        %v134 = vshrl.u32 %v133, 7
        %vm136 = vcmp.eq.s32.totalorder %v132, %v134
        %v137 = vlaneseq
        %v138 = vand.u32 %v137, 127
        %vm139 = vcmp.eq.s32.totalorder %v138, 2
        %v140 = vsel %vm139, 1.0, -1.0
        %v141 = vsel %vm136, %v140, 0.0
        %s142 = scalar_lea.vmem [#allocation4], 1
        %v143 = vld [vmem:[%s142] ss:$0 sm:$0xff]
        %v144 = vxor.u32 %v143, 2147483648
        %v145 = vlaneseq
        %v146 = vand.u32 %v145, 127
        %vm147 = vcmp.eq.s32.totalorder %v146, 1
        %v148 = vmul.f32 %v144, %v141
        %149 = vadd.xlane.f32.xlu0 %v148
        %v150 = vpop.xlane.xlu0 %149
        %v151 = vsel %vm147, %v150, %v141
        %v152 = vld [vmem:[#allocation4] ss:$0 sm:$0xff]
        %v153 = vxor.u32 %v152, 2147483648
        %v154 = vlaneseq
        %v155 = vand.u32 %v154, 127
        %vm156 = vcmp.eq.s32.totalorder %v155, 0
        %v157 = vmul.f32 %v153, %v151
        %158 = vadd.xlane.f32.xlu0 %v157
        %v159 = vpop.xlane.xlu0 %158
        %v160 = vsel %vm156, %v159, %v151
        %v161 = vrcp.pop %v124
        %v162 = vmul.f32 %v160, %v161
        %vm163 = vweird.f32 %v124
        %v164 = vsel %vm163, %v160, %v162
        %165 = vst [vmem:[#allocation2] sm:$0xff] %v164
        %s167 = sshll.u32 1, 4
        %s168 = ssub.s32 %s167, 1
        %v170 = vld [vmem:[#allocation2] sm:%s168]
        %s171 = sshll.u32 1, 4
        %s172 = ssub.s32 %s171, 1
        %173 = vst [vmem:[%s108] sm:%s172] %v170
        %s174 = sand.u32 %s8, 1
        %s175 = sand.u32 %s8, 1
        %s176 = smul.addr %s175, 4
        %s177 = scalar_lea.vmem [#allocation3], %s176
        %s178 = sadd.s32 %s17, %s16
        %s179 = sadd.s32 %s178, %s15
        %s180 = sadd.s32 %s179, %s14
        %s181 = smul.addr %s180, 4
        %s182 = scalar_lea.vmem %s1, %s181
        // Predicated region
        $region51: #{custom-call.12} parent=49 // pred_check
          _
        $region52: #{custom-call.12} parent=49 // pred_check_branch
          %184 = sbr.rel (0) target = $region54
        $region53: #{custom-call.12} parent=49 // pred_region
          // Predicated region
          $region55: #{custom-call.12} parent=53 // pred_check
            _
          $region56: #{custom-call.12} parent=53 // pred_check_branch
            %186 = sbr.rel target = $region58
          $region57: #{custom-call.12} parent=53 // pred_region
            // Predicated region
            $region70: #{custom-call.12} parent=57 // pred_check
              _
            $region71: #{custom-call.12} parent=57 // pred_check_branch
              %202 = sbr.rel (0) target = $region73
            $region72: #{custom-call.12} parent=57 // pred_region
              %s204 = ssub.s32 16, 1
              loop: start=0, step=1, limit=1
              $region74: #{custom-call.12} parent=72 // loop_pre_header
                _
              $region75: #{custom-call.12} parent=72 // loop_header
                %s206 = sphi 0, %s210
                %p207 = scmp.ge.s32.totalorder %s206, 1
                %s211 = sphi %s177, %s177
                %s212 = sphi %s182, %s182
              $region76: #{custom-call.12} parent=72 // loop_header_branch
                %209 = sbr.rel (%p207) target = $region80
              $region77: #{custom-call.12} parent=72 // loop_body
                %v213 = vld [vmem:[%s211] sm:%s204]
                %214 = vst [vmem:[%s212] sm:%s204] %v213
              $region78: #{custom-call.12} parent=72 // loop_footer
                %s210 = sadd.s32 1, %s206
              $region79: #{custom-call.12} parent=72 // loop_footer_branch
                %205 = sbr.rel target = $region75
              $region80: #{custom-call.12} parent=72 // loop_exit
                _
            $region73: #{custom-call.12} parent=57 // pred_fallthru
              _
          $region58: #{custom-call.12} parent=53 // pred_fallthru
            _
          // Predicated region
          $region59: #{custom-call.12} parent=53 // pred_check
            _
          $region60: #{custom-call.12} parent=53 // pred_check_branch
            %188 = sbr.rel (0) target = $region62
          $region61: #{custom-call.12} parent=53 // pred_region
            %s190 = ssub.s32 16, 1
            loop: start=0, step=1, limit=1
            $region63: #{custom-call.12} parent=61 // loop_pre_header
              _
            $region64: #{custom-call.12} parent=61 // loop_header
              %s192 = sphi 0, %s196
              %p193 = scmp.ge.s32.totalorder %s192, 1
              %s197 = sphi %s177, %s177
              %s198 = sphi %s182, %s182
            $region65: #{custom-call.12} parent=61 // loop_header_branch
              %195 = sbr.rel (%p193) target = $region69
            $region66: #{custom-call.12} parent=61 // loop_body
              %v199 = vld [vmem:[%s197] sm:%s190]
              %200 = vst [vmem:[%s198] sm:%s190] %v199
            $region67: #{custom-call.12} parent=61 // loop_footer
              %s196 = sadd.s32 1, %s192
            $region68: #{custom-call.12} parent=61 // loop_footer_branch
              %191 = sbr.rel target = $region64
            $region69: #{custom-call.12} parent=61 // loop_exit
              _
          $region62: #{custom-call.12} parent=53 // pred_fallthru
            _
        $region54: #{custom-call.12} parent=49 // pred_fallthru
          _
        %215 = vnop
      $region50: #{custom-call.12} parent=5 // pred_fallthru
        _
      %p216 = scmp.le.s32.totalorder 2, %s3
      // Predicated region
      $region81: #{custom-call.12} parent=5 // pred_check
        %p217 = pneg %p216
      $region82: #{custom-call.12} parent=5 // pred_check_branch
        %219 = sbr.rel (%p217) target = $region84
      $region83: #{custom-call.12} parent=5 // pred_region
        %s220 = ssub.s32 %s3, 2
        %s221 = sand.u32 %s9, 1
        %s222 = sand.u32 %s9, 1
        %s223 = smul.addr %s222, 4
        %s224 = scalar_lea.vmem [#allocation3], %s223
      $region84: #{custom-call.12} parent=5 // pred_fallthru
        _
    $region6: #{custom-call.12} parent=1 // loop_footer
      %s7 = sadd.s32 1, %s3
    $region7: #{custom-call.12} parent=1 // loop_footer_branch
      %2 = sbr.rel target = $region3
    $region8: #{custom-call.12} parent=1 // loop_exit
      _

// kernel: custom-call.13
$region0: #{custom-call.13}
  %s0 = inlined_call_operand.vmem [shape: f32[2,1,3,3], index: 0, kind: input, shape index: {}]
  %s1 = inlined_call_operand.vmem [shape: f32[2,1,3,3], index: 1, kind: output, shape index: {}]
  $region1: #{custom-call.13} parent=0
    #allocation0 [shape = 'u8[4096]{0}', space=vmem, size = 0x1000, scoped, tag = 'operand span for operand 0']
    #allocation1 [shape = 'u8[4096]{0}', space=vmem, size = 0x1000, scoped, tag = 'packed  for operand 0']
    #allocation2 [shape = 'u8[4096]{0}', space=vmem, size = 0x1000, scoped, tag = 'operand span for operand 1']
    #allocation3 [shape = 'u8[4096]{0}', space=vmem, size = 0x1000, scoped, tag = 'packed  for operand 1']
    loop: start=0, step=1, limit=4
    $region2: #{custom-call.13} parent=1 // loop_pre_header
      _
    $region3: #{custom-call.13} parent=1 // loop_header
      %s3 = sphi 0, %s7
      %p4 = scmp.ge.s32.totalorder %s3, 4
      %s10 = sphi 0, %s36
      %s11 = sphi 0, %s32
      %s12 = sphi 0, %s28
      %s13 = sphi 0, %s24
      %s14 = sphi 0, %s10
      %s15 = sphi 0, %s11
      %s16 = sphi 0, %s12
      %s17 = sphi 0, %s13
      %s18 = sphi 0, %s14
      %s19 = sphi 0, %s15
      %s20 = sphi 0, %s16
      %s21 = sphi 0, %s17
    $region4: #{custom-call.13} parent=1 // loop_header_branch
      %6 = sbr.rel (%p4) target = $region8
    $region5: #{custom-call.13} parent=1 // loop_body
      %s8 = ssub.s32 %s3, 1
      %s9 = ssub.s32 %s3, 2
      %s22 = sadd.s32 1, %s13
      %p23 = scmp.ge.s32.totalorder %s22, 1
      %s24 = scalar_select %p23, 0, %s22
      %s25 = sadd.s32 1, %s12
      %s26 = scalar_select %p23, %s25, %s12
      %p27 = scmp.ge.s32.totalorder %s26, 1
      %s28 = scalar_select %p27, 0, %s26
      %s29 = sadd.s32 1, %s11
      %s30 = scalar_select %p27, %s29, %s11
      %p31 = scmp.ge.s32.totalorder %s30, 1
      %s32 = scalar_select %p31, 0, %s30
      %s33 = sadd.s32 1, %s10
      %s34 = scalar_select %p31, %s33, %s10
      %p35 = scmp.ge.s32.totalorder %s34, 2
      %s36 = scalar_select %p35, 0, %s34
      %p37 = scmp.le.s32.totalorder 1, %s3
      %p38 = scmp.lt.s32.totalorder %s3, 3
      %p39 = pnand %p37, %p38
      %p40 = pneg %p39
      // Predicated region
      $region9: #{custom-call.13} parent=5 // pred_check
        _
      $region10: #{custom-call.13} parent=5 // pred_check_branch
        %42 = sbr.rel (%p39) target = $region12
      $region11: #{custom-call.13} parent=5 // pred_region
        %s43 = ssub.s32 %s3, 1
      $region12: #{custom-call.13} parent=5 // pred_fallthru
        _
      %p44 = scmp.lt.s32.totalorder %s3, 2
      // Predicated region
      $region13: #{custom-call.13} parent=5 // pred_check
        %p45 = pneg %p44
      $region14: #{custom-call.13} parent=5 // pred_check_branch
        %47 = sbr.rel (%p45) target = $region16
      $region15: #{custom-call.13} parent=5 // pred_region
        %s48 = sand.u32 %s3, 1
        %s49 = sand.u32 %s3, 1
        %s50 = smul.addr %s49, 4
        %s51 = scalar_lea.vmem [#allocation1], %s50
        %s52 = sadd.s32 %s13, %s12
        %s53 = sadd.s32 %s52, %s11
        %s54 = sadd.s32 %s53, %s10
        %s55 = smul.addr %s54, 4
        %s56 = scalar_lea.vmem %s0, %s55
        // Predicated region
        $region17: #{custom-call.13} parent=15 // pred_check
          _
        $region18: #{custom-call.13} parent=15 // pred_check_branch
          %58 = sbr.rel (0) target = $region20
        $region19: #{custom-call.13} parent=15 // pred_region
          // Predicated region
          $region21: #{custom-call.13} parent=19 // pred_check
            _
          $region22: #{custom-call.13} parent=19 // pred_check_branch
            %60 = sbr.rel target = $region24
          $region23: #{custom-call.13} parent=19 // pred_region
            // Predicated region
            $region36: #{custom-call.13} parent=23 // pred_check
              _
            $region37: #{custom-call.13} parent=23 // pred_check_branch
              %76 = sbr.rel (0) target = $region39
            $region38: #{custom-call.13} parent=23 // pred_region
              %s78 = ssub.s32 16, 1
              loop: start=0, step=1, limit=1
              $region40: #{custom-call.13} parent=38 // loop_pre_header
                _
              $region41: #{custom-call.13} parent=38 // loop_header
                %s80 = sphi 0, %s84
                %p81 = scmp.ge.s32.totalorder %s80, 1
                %s85 = sphi %s56, %s56
                %s86 = sphi %s51, %s51
              $region42: #{custom-call.13} parent=38 // loop_header_branch
                %83 = sbr.rel (%p81) target = $region46
              $region43: #{custom-call.13} parent=38 // loop_body
                %v87 = vld [vmem:[%s85] sm:%s78]
                %88 = vst [vmem:[%s86] sm:%s78] %v87
              $region44: #{custom-call.13} parent=38 // loop_footer
                %s84 = sadd.s32 1, %s80
              $region45: #{custom-call.13} parent=38 // loop_footer_branch
                %79 = sbr.rel target = $region41
              $region46: #{custom-call.13} parent=38 // loop_exit
                _
            $region39: #{custom-call.13} parent=23 // pred_fallthru
              _
          $region24: #{custom-call.13} parent=19 // pred_fallthru
            _
          // Predicated region
          $region25: #{custom-call.13} parent=19 // pred_check
            _
          $region26: #{custom-call.13} parent=19 // pred_check_branch
            %62 = sbr.rel (0) target = $region28
          $region27: #{custom-call.13} parent=19 // pred_region
            %s64 = ssub.s32 16, 1
            loop: start=0, step=1, limit=1
            $region29: #{custom-call.13} parent=27 // loop_pre_header
              _
            $region30: #{custom-call.13} parent=27 // loop_header
              %s66 = sphi 0, %s70
              %p67 = scmp.ge.s32.totalorder %s66, 1
              %s71 = sphi %s56, %s56
              %s72 = sphi %s51, %s51
            $region31: #{custom-call.13} parent=27 // loop_header_branch
              %69 = sbr.rel (%p67) target = $region35
            $region32: #{custom-call.13} parent=27 // loop_body
              %v73 = vld [vmem:[%s71] sm:%s64]
              %74 = vst [vmem:[%s72] sm:%s64] %v73
            $region33: #{custom-call.13} parent=27 // loop_footer
              %s70 = sadd.s32 1, %s66
            $region34: #{custom-call.13} parent=27 // loop_footer_branch
              %65 = sbr.rel target = $region30
            $region35: #{custom-call.13} parent=27 // loop_exit
              _
          $region28: #{custom-call.13} parent=19 // pred_fallthru
            _
        $region20: #{custom-call.13} parent=15 // pred_fallthru
          _
        %89 = vnop
      $region16: #{custom-call.13} parent=5 // pred_fallthru
        _
      %p90 = scmp.le.s32.totalorder 1, %s3
      %p91 = scmp.lt.s32.totalorder %s3, 3
      %p92 = pnand %p90, %p91
      %p93 = pneg %p92
      // Predicated region
      $region47: #{custom-call.13} parent=5 // pred_check
        _
      $region48: #{custom-call.13} parent=5 // pred_check_branch
        %95 = sbr.rel (%p92) target = $region50
      $region49: #{custom-call.13} parent=5 // pred_region
        #allocation4 [shape = 'f32[3,3]{1,0}', space=vmem, size = 0x1000, scoped, tag = 'rescaled input a']
        %s96 = ssub.s32 %s3, 1
        %s97 = sand.u32 %s8, 1
        %s98 = sand.u32 %s8, 1
        %s99 = smul.addr %s98, 4
        %s100 = scalar_lea.vmem [#allocation1], %s99
        %s101 = sand.u32 %s8, 1
        %s102 = sand.u32 %s8, 1
        %s103 = smul.addr %s102, 4
        %s104 = scalar_lea.vmem [#allocation1], %s103
        %s105 = sand.u32 %s8, 1
        %s106 = sand.u32 %s8, 1
        %s107 = smul.addr %s106, 4
        %s108 = scalar_lea.vmem [#allocation3], %s107
        %s110 = sshll.u32 1, 4
        %s111 = ssub.s32 %s110, 1
        %v112 = vld [vmem:[%s104] sm:%s111]
        %113 = vst [vmem:[#allocation0] sm:%s111] %v112
        %v114 = vlaneseq
        %v115 = vand.u32 %v114, 127
        %vm116 = vcmp.lt.s32.totalorder %v115, 3
        %v117 = vlaneseq
        %v118 = vshrl.u32 %v117, 7
        %vm120 = vcmp.eq.s32.totalorder %v118, %v115
        %v121 = vld [vmem:[#allocation0] sm:$0xff]
        %v122 = vsel %vm120, %v121, 0.0
        %123 = vadd.xlane.f32.xlu0 %v122
        %v124 = vpop.xlane.xlu0 %123
        %vm125 = vcmp.ge.s32.totalorder %v118, %v115
        %vm126 = vmand %vm125, %vm116
        %v127 = vsel %vm126, %v121, 0.0
        %v128 = vrcp.pop %v124
        %v129 = vmul.f32 %v127, %v128
        %130 = vst [vmem:[#allocation4] sm:$0xff] %v129
        %v131 = vlaneseq
        %v132 = vand.u32 %v131, 127
        %v133 = vlaneseq
        %v134 = vshrl.u32 %v133, 7
        %vm136 = vcmp.eq.s32.totalorder %v132, %v134
        %v137 = vlaneseq
        %v138 = vand.u32 %v137, 127
        %vm139 = vcmp.eq.s32.totalorder %v138, 0
        %v140 = vsel %vm139, 1.0, -1.0
        %v141 = vsel %vm136, %v140, 0.0
        %s142 = scalar_lea.vmem [#allocation4], 1
        %v143 = vld [vmem:[%s142] ss:$0 sm:$0xff]
        %v144 = vxor.u32 %v143, 2147483648
        %v145 = vlaneseq
        %v146 = vand.u32 %v145, 127
        %vm147 = vcmp.eq.s32.totalorder %v146, 1
        %v148 = vmul.f32 %v144, %v141
        %149 = vadd.xlane.f32.xlu0 %v148
        %v150 = vpop.xlane.xlu0 %149
        %v151 = vsel %vm147, %v150, %v141
        %s152 = scalar_lea.vmem [#allocation4], 2
        %v153 = vld [vmem:[%s152] ss:$0 sm:$0xff]
        %v154 = vxor.u32 %v153, 2147483648
        %v155 = vlaneseq
        %v156 = vand.u32 %v155, 127
        %vm157 = vcmp.eq.s32.totalorder %v156, 2
        %v158 = vmul.f32 %v154, %v151
        %159 = vadd.xlane.f32.xlu0 %v158
        %v160 = vpop.xlane.xlu0 %159
        %v161 = vsel %vm157, %v160, %v151
        %v162 = vrcp.pop %v124
        %v163 = vmul.f32 %v161, %v162
        %vm164 = vweird.f32 %v124
        %v165 = vsel %vm164, %v161, %v163
        %166 = vst [vmem:[#allocation2] sm:$0xff] %v165
        %s168 = sshll.u32 1, 4
        %s169 = ssub.s32 %s168, 1
        %v171 = vld [vmem:[#allocation2] sm:%s169]
        %s172 = sshll.u32 1, 4
        %s173 = ssub.s32 %s172, 1
        %174 = vst [vmem:[%s108] sm:%s173] %v171
        %s175 = sand.u32 %s8, 1
        %s176 = sand.u32 %s8, 1
        %s177 = smul.addr %s176, 4
        %s178 = scalar_lea.vmem [#allocation3], %s177
        %s179 = sadd.s32 %s17, %s16
        %s180 = sadd.s32 %s179, %s15
        %s181 = sadd.s32 %s180, %s14
        %s182 = smul.addr %s181, 4
        %s183 = scalar_lea.vmem %s1, %s182
        // Predicated region
        $region51: #{custom-call.13} parent=49 // pred_check
          _
        $region52: #{custom-call.13} parent=49 // pred_check_branch
          %185 = sbr.rel (0) target = $region54
        $region53: #{custom-call.13} parent=49 // pred_region
          // Predicated region
          $region55: #{custom-call.13} parent=53 // pred_check
            _
          $region56: #{custom-call.13} parent=53 // pred_check_branch
            %187 = sbr.rel target = $region58
          $region57: #{custom-call.13} parent=53 // pred_region
            // Predicated region
            $region70: #{custom-call.13} parent=57 // pred_check
              _
            $region71: #{custom-call.13} parent=57 // pred_check_branch
              %203 = sbr.rel (0) target = $region73
            $region72: #{custom-call.13} parent=57 // pred_region
              %s205 = ssub.s32 16, 1
              loop: start=0, step=1, limit=1
              $region74: #{custom-call.13} parent=72 // loop_pre_header
                _
              $region75: #{custom-call.13} parent=72 // loop_header
                %s207 = sphi 0, %s211
                %p208 = scmp.ge.s32.totalorder %s207, 1
                %s212 = sphi %s178, %s178
                %s213 = sphi %s183, %s183
              $region76: #{custom-call.13} parent=72 // loop_header_branch
                %210 = sbr.rel (%p208) target = $region80
              $region77: #{custom-call.13} parent=72 // loop_body
                %v214 = vld [vmem:[%s212] sm:%s205]
                %215 = vst [vmem:[%s213] sm:%s205] %v214
              $region78: #{custom-call.13} parent=72 // loop_footer
                %s211 = sadd.s32 1, %s207
              $region79: #{custom-call.13} parent=72 // loop_footer_branch
                %206 = sbr.rel target = $region75
              $region80: #{custom-call.13} parent=72 // loop_exit
                _
            $region73: #{custom-call.13} parent=57 // pred_fallthru
              _
          $region58: #{custom-call.13} parent=53 // pred_fallthru
            _
          // Predicated region
          $region59: #{custom-call.13} parent=53 // pred_check
            _
          $region60: #{custom-call.13} parent=53 // pred_check_branch
            %189 = sbr.rel (0) target = $region62
          $region61: #{custom-call.13} parent=53 // pred_region
            %s191 = ssub.s32 16, 1
            loop: start=0, step=1, limit=1
            $region63: #{custom-call.13} parent=61 // loop_pre_header
              _
            $region64: #{custom-call.13} parent=61 // loop_header
              %s193 = sphi 0, %s197
              %p194 = scmp.ge.s32.totalorder %s193, 1
              %s198 = sphi %s178, %s178
              %s199 = sphi %s183, %s183
            $region65: #{custom-call.13} parent=61 // loop_header_branch
              %196 = sbr.rel (%p194) target = $region69
            $region66: #{custom-call.13} parent=61 // loop_body
              %v200 = vld [vmem:[%s198] sm:%s191]
              %201 = vst [vmem:[%s199] sm:%s191] %v200
            $region67: #{custom-call.13} parent=61 // loop_footer
              %s197 = sadd.s32 1, %s193
            $region68: #{custom-call.13} parent=61 // loop_footer_branch
              %192 = sbr.rel target = $region64
            $region69: #{custom-call.13} parent=61 // loop_exit
              _
          $region62: #{custom-call.13} parent=53 // pred_fallthru
            _
        $region54: #{custom-call.13} parent=49 // pred_fallthru
          _
        %216 = vnop
      $region50: #{custom-call.13} parent=5 // pred_fallthru
        _
      %p217 = scmp.le.s32.totalorder 2, %s3
      // Predicated region
      $region81: #{custom-call.13} parent=5 // pred_check
        %p218 = pneg %p217
      $region82: #{custom-call.13} parent=5 // pred_check_branch
        %220 = sbr.rel (%p218) target = $region84
      $region83: #{custom-call.13} parent=5 // pred_region
        %s221 = ssub.s32 %s3, 2
        %s222 = sand.u32 %s9, 1
        %s223 = sand.u32 %s9, 1
        %s224 = smul.addr %s223, 4
        %s225 = scalar_lea.vmem [#allocation3], %s224
      $region84: #{custom-call.13} parent=5 // pred_fallthru
        _
    $region6: #{custom-call.13} parent=1 // loop_footer
      %s7 = sadd.s32 1, %s3
    $region7: #{custom-call.13} parent=1 // loop_footer_branch
      %2 = sbr.rel target = $region3
    $region8: #{custom-call.13} parent=1 // loop_exit
      _

// kernel: meta_forward.3
$region0: #{meta_forward.3}
  #allocation0 [shape = 'u32[]', space=smem, size = 0x4, offset = 0x4, fixed_abs, tag = 'smem constant byte address 0x4 - core index']
  #allocation1 [shape = 'u32[144,128]{1,0:T(1,128)}', space=vmem, size = 0x12000, scoped, tag = 'internal scratch']
  %s0 = inlined_call_operand.vmem [shape: bf16[2,4,4], index: 0, kind: input, shape index: {}]
  %s1 = inlined_call_operand.vmem [shape: f32[4,1], index: 1, kind: input, shape index: {}]
  %s2 = inlined_call_operand.vmem [shape: f32[2,4,256], index: 2, kind: input, shape index: {}]
  %s3 = inlined_call_operand.vmem [shape: f32[2,4,256], index: 3, kind: output, shape index: {}]
  %s4 = sld [smem:[#allocation0]]
  $region45: #{meta_forward.3} parent=0
    _
  %s6 = ssub.s32 1, %s4
  %s7 = scalar_select 0, %s6, %s4
  loop: start=0, step=1, limit=4
  $region2: #{meta_forward.3} parent=0 // loop_pre_header
    _
  $region3: #{meta_forward.3} parent=0 // loop_header
    %s9 = sphi 0, %s13
    %p10 = scmp.ge.s32.totalorder %s9, 4
    %s16 = sphi 0, %s28
    %s17 = sphi 0, %s24
    %s18 = sphi 0, %s16
    %s19 = sphi 0, %s17
    %s20 = sphi 0, %s18
    %s21 = sphi 0, %s19
    %s31 = sphi 0, %s33
    %s34 = sphi 0, %s31
    %s35 = sphi 0, %s34
    %s51 = sphi 0, %s35
    %s55 = sphi 0, %s55
    %s57 = sphi 0, %s55
    %s58 = sphi 0, %s57
    %s72 = sphi 0, %s58
    %s80 = sphi 0, %s82
    %s83 = sphi 0, %s80
    %s84 = sphi 0, %s83
    %s100 = sphi 0, %s84
    %s108 = sphi 0, %s110
    %s111 = sphi 0, %s108
    %s112 = sphi 0, %s111
    %s128 = sphi 0, %s112
  $region4: #{meta_forward.3} parent=0 // loop_header_branch
    %12 = sbr.rel (%p10) target = $region8
  $region5: #{meta_forward.3} parent=0 // loop_body
    %s14 = ssub.s32 %s9, 1
    %s15 = ssub.s32 %s9, 2
    %s22 = sadd.s32 1, %s17
    %p23 = scmp.ge.s32.totalorder %s22, 1
    %s24 = scalar_select %p23, 0, %s22
    %s25 = sadd.s32 1, %s16
    %s26 = scalar_select %p23, %s25, %s16
    %p27 = scmp.ge.s32.totalorder %s26, 2
    %s28 = scalar_select %p27, 0, %s26
    %s29 = ssub.s32 %s16, %s28
    %p30 = scmp.eq.s32.totalorder %s29, 0
    %s32 = sadd.s32 %s31, 1
    %s33 = scalar_select %p30, %s31, %s32
    %p36 = pneg %p30
    %p37 = scmp.eq.s32.totalorder %s9, 1
    %p38 = por %p36, %p37
    %p39 = scmp.ne.s32.totalorder %s31, %s34
    %p40 = scmp.eq.s32.totalorder %s9, 0
    %p41 = por %p39, %p40
    %p42 = scmp.ne.s32.totalorder %s31, %s34
    %p43 = scmp.eq.s32.totalorder %s14, 1
    %p44 = por %p42, %p43
    %p45 = scmp.ne.s32.totalorder %s34, %s35
    %p46 = scmp.eq.s32.totalorder %s14, 0
    %p47 = por %p45, %p46
    %p48 = scmp.ne.s32.totalorder %s34, %s35
    %p49 = scmp.eq.s32.totalorder %s15, 1
    %p50 = por %p48, %p49
    %p52 = scmp.ne.s32.totalorder %s35, %s51
    %p53 = scmp.eq.s32.totalorder %s15, 0
    %p54 = por %p52, %p53
    %s56 = sadd.s32 %s55, 1
    %p59 = scmp.eq.s32.totalorder %s9, 1
    %p60 = scmp.ne.s32.totalorder %s55, %s57
    %p61 = scmp.eq.s32.totalorder %s9, 0
    %p62 = por %p60, %p61
    %p63 = scmp.ne.s32.totalorder %s55, %s57
    %p64 = scmp.eq.s32.totalorder %s14, 1
    %p65 = por %p63, %p64
    %p66 = scmp.ne.s32.totalorder %s57, %s58
    %p67 = scmp.eq.s32.totalorder %s14, 0
    %p68 = por %p66, %p67
    %p69 = scmp.ne.s32.totalorder %s57, %s58
    %p70 = scmp.eq.s32.totalorder %s15, 1
    %p71 = por %p69, %p70
    %p73 = scmp.ne.s32.totalorder %s58, %s72
    %p74 = scmp.eq.s32.totalorder %s15, 0
    %p75 = por %p73, %p74
    %s76 = ssub.s32 %s16, %s28
    %s77 = ssub.s32 %s17, %s24
    %s78 = sor.u32 %s76, %s77
    %p79 = scmp.eq.s32.totalorder %s78, 0
    %s81 = sadd.s32 %s80, 1
    %s82 = scalar_select %p79, %s80, %s81
    %p85 = pneg %p79
    %p86 = scmp.eq.s32.totalorder %s9, 1
    %p87 = por %p85, %p86
    %p88 = scmp.ne.s32.totalorder %s80, %s83
    %p89 = scmp.eq.s32.totalorder %s9, 0
    %p90 = por %p88, %p89
    %p91 = scmp.ne.s32.totalorder %s80, %s83
    %p92 = scmp.eq.s32.totalorder %s14, 1
    %p93 = por %p91, %p92
    %p94 = scmp.ne.s32.totalorder %s83, %s84
    %p95 = scmp.eq.s32.totalorder %s14, 0
    %p96 = por %p94, %p95
    %p97 = scmp.ne.s32.totalorder %s83, %s84
    %p98 = scmp.eq.s32.totalorder %s15, 1
    %p99 = por %p97, %p98
    %p101 = scmp.ne.s32.totalorder %s84, %s100
    %p102 = scmp.eq.s32.totalorder %s15, 0
    %p103 = por %p101, %p102
    %s104 = ssub.s32 %s16, %s28
    %s105 = ssub.s32 %s17, %s24
    %s106 = sor.u32 %s104, %s105
    %p107 = scmp.eq.s32.totalorder %s106, 0
    %s109 = sadd.s32 %s108, 1
    %s110 = scalar_select %p107, %s108, %s109
    %p113 = pneg %p107
    %p114 = scmp.eq.s32.totalorder %s9, 1
    %p115 = por %p113, %p114
    %p116 = scmp.ne.s32.totalorder %s108, %s111
    %p117 = scmp.eq.s32.totalorder %s9, 0
    %p118 = por %p116, %p117
    %p119 = scmp.ne.s32.totalorder %s108, %s111
    %p120 = scmp.eq.s32.totalorder %s14, 1
    %p121 = por %p119, %p120
    %p122 = scmp.ne.s32.totalorder %s111, %s112
    %p123 = scmp.eq.s32.totalorder %s14, 0
    %p124 = por %p122, %p123
    %p125 = scmp.ne.s32.totalorder %s111, %s112
    %p126 = scmp.eq.s32.totalorder %s15, 1
    %p127 = por %p125, %p126
    %p129 = scmp.ne.s32.totalorder %s112, %s128
    %p130 = scmp.eq.s32.totalorder %s15, 0
    %p131 = por %p129, %p130
    %p132 = scmp.le.s32.totalorder 1, %s9
    %p133 = scmp.lt.s32.totalorder %s9, 3
    %p134 = pnand %p132, %p133
    %p135 = pneg %p134
    // Predicated region
    $region9: #{meta_forward.3} parent=5 // pred_check
      _
    $region10: #{meta_forward.3} parent=5 // pred_check_branch
      %137 = sbr.rel (%p134) target = $region12
    $region11: #{meta_forward.3} parent=5 // pred_region
      %s138 = ssub.s32 %s9, 1
      // Predicated region
      $region13: #{meta_forward.3} parent=11 // pred_check
        %p139 = pneg %p68
      $region14: #{meta_forward.3} parent=11 // pred_check_branch
        %141 = sbr.rel (%p139) target = $region16
      $region15: #{meta_forward.3} parent=11 // pred_region
        _
      $region16: #{meta_forward.3} parent=11 // pred_fallthru
        _
    $region12: #{meta_forward.3} parent=5 // pred_fallthru
      _
    %p142 = scmp.lt.s32.totalorder %s9, 2
    // Predicated region
    $region17: #{meta_forward.3} parent=5 // pred_check
      %p143 = pneg %p142
    $region18: #{meta_forward.3} parent=5 // pred_check_branch
      %145 = sbr.rel (%p143) target = $region20
    $region19: #{meta_forward.3} parent=5 // pred_region
      // Predicated region
      $region21: #{meta_forward.3} parent=19 // pred_check
        %p146 = pneg %p41
      $region22: #{meta_forward.3} parent=19 // pred_check_branch
        %148 = sbr.rel (%p146) target = $region24
      $region23: #{meta_forward.3} parent=19 // pred_region
        %p149 = scmp.lt.s32.totalorder %s16, 1
        %s150 = scalar_select %p149, %s16, 1
        %s151 = smul.addr %s150, 2
        %s152 = scalar_lea.vmem %s0, %s151
      $region24: #{meta_forward.3} parent=19 // pred_fallthru
        _
      // Predicated region
      $region25: #{meta_forward.3} parent=19 // pred_check
        %p153 = pneg %p90
      $region26: #{meta_forward.3} parent=19 // pred_check_branch
        %155 = sbr.rel (%p153) target = $region28
      $region27: #{meta_forward.3} parent=19 // pred_region
        %s156 = smul.u32 2, %s17
        %p157 = scmp.lt.s32.totalorder %s16, 1
        %s158 = scalar_select %p157, %s16, 1
        %p159 = scmp.lt.s32.totalorder %s156, 1
        %s160 = scalar_select %p159, %s156, 1
        %s161 = smul.addr %s158, 2
        %s162 = sadd.s32 %s160, %s161
        %s163 = smul.addr %s162, 4
        %s164 = scalar_lea.vmem %s2, %s163
        %s165 = smul.u32 2, %s17
      $region28: #{meta_forward.3} parent=19 // pred_fallthru
        _
    $region20: #{meta_forward.3} parent=5 // pred_fallthru
      _
    %p166 = scmp.le.s32.totalorder 1, %s9
    %p167 = scmp.lt.s32.totalorder %s9, 3
    %p168 = pnand %p166, %p167
    %p169 = pneg %p168
    // Predicated region
    $region29: #{meta_forward.3} parent=5 // pred_check
      _
    $region30: #{meta_forward.3} parent=5 // pred_check_branch
      %171 = sbr.rel (%p168) target = $region32
    $region31: #{meta_forward.3} parent=5 // pred_region
      %s172 = ssub.s32 %s9, 1
      %p173 = scmp.lt.s32.totalorder %s18, 1
      %s174 = scalar_select %p173, %s18, 1
      %s175 = smul.addr %s174, 2
      %s176 = scalar_lea.vmem %s0, %s175
      %p177 = pneg %p47
      %p178 = pneg %p44
      %p179 = pneg %p68
      %p180 = pneg %p65
      %s181 = smul.u32 2, %s19
      %p182 = scmp.lt.s32.totalorder %s18, 1
      %s183 = scalar_select %p182, %s18, 1
      %p184 = scmp.lt.s32.totalorder %s181, 1
      %s185 = scalar_select %p184, %s181, 1
      %s186 = smul.addr %s183, 2
      %s187 = sadd.s32 %s185, %s186
      %s188 = smul.addr %s187, 4
      %s189 = scalar_lea.vmem %s2, %s188
      %p190 = pneg %p96
      %p191 = pneg %p93
      %p192 = pneg %p124
      %p193 = pneg %p121
      %s194 = smul.u32 2, %s19
      %p195 = scmp.lt.s32.totalorder %s18, 1
      %s196 = scalar_select %p195, %s18, 1
      %p197 = scmp.lt.s32.totalorder %s194, 1
      %s198 = scalar_select %p197, %s194, 1
      %s199 = smul.addr %s196, 2
      %s200 = sadd.s32 %s198, %s199
      %s201 = smul.addr %s200, 4
      %s202 = scalar_lea.vmem %s3, %s201
      %p203 = scmp.lt.s32.totalorder %s18, 1
      %s204 = scalar_select %p203, %s18, 1
      %s205 = smul.addr %s204, 2
      %s206 = scalar_lea.vmem %s0, %s205
      %s207 = smul.u32 2, %s19
      %p208 = scmp.lt.s32.totalorder %s18, 1
      %s209 = scalar_select %p208, %s18, 1
      %p210 = scmp.lt.s32.totalorder %s207, 1
      %s211 = scalar_select %p210, %s207, 1
      %s212 = smul.addr %s209, 2
      %s213 = sadd.s32 %s211, %s212
      %s214 = smul.addr %s213, 4
      %s215 = scalar_lea.vmem %s2, %s214
      %s216 = smul.u32 2, %s19
      %s217 = smul.u32 2, %s19
      %p218 = scmp.lt.s32.totalorder %s18, 1
      %s219 = scalar_select %p218, %s18, 1
      %p220 = scmp.lt.s32.totalorder %s217, 1
      %s221 = scalar_select %p220, %s217, 1
      %s222 = smul.addr %s219, 2
      %s223 = sadd.s32 %s221, %s222
      %s224 = smul.addr %s223, 4
      %s225 = scalar_lea.vmem %s3, %s224
      %s226 = smul.u32 2, %s19
      %v228 = vld [vmem:[%s215] sm:$0xff]
      %v230 = vcombine.high %v228, %v228
      %v232 = vpack.c.bf16 %v228, %v228
      %v233 = vpack.c.bf16 %v230, %v230
      %v234 = vld [vmem:[%s206] sm:$0x3]
      %v235 = vld [vmem:[%s1] sm:$0xf]
      %237 = vset.pattern.permute.xlu0 0
      %238 = vperm.xlu0 %237, %v235
      %v239 = vpop.permute.xlu0 %238
      %vm241 = vcmask 31744
      %v243 = vsel %vm241, %v234, 0
      %vm245 = vcmask 1041408
      %v247 = vsel %vm245, %v232, 0
      %v250 = vsel %vm245, %v233, 0
      %252 = vmatprep.subr.bf16.mxu0 0
      %253 = vmatpush1.bf16.msra.mxu0 0
      %254 = vmatprep.subr.bf16.mxu0 0
      %255 = vmatpush1.bf16.msra.mxu0 0
      %256 = vmatprep.subr.bf16.mxu0 0
      %257 = vmatpush1.bf16.msra.mxu0 0
      %258 = vmatprep.subr.bf16.mxu0 0
      %259 = vmatpush1.bf16.msra.mxu0 0
      %260 = vmatprep.subr.bf16.mxu0 0
      %261 = vmatpush1.bf16.msra.mxu0 0
      %262 = vmatprep.subr.bf16.mxu0 0
      %263 = vmatpush1.bf16.msra.mxu0 0
      %264 = vmatprep.subr.bf16.mxu0 0
      %265 = vmatpush1.bf16.msra.mxu0 0
      %266 = vmatprep.subr.bf16.mxu0 %v250
      %267 = vmatpush1.bf16.msra.mxu0 %v247
      %268 = vmatprep.subr.bf16.mxu0 0
      %269 = vmatpush2.bf16.msra.mxu0 0
      %270 = vmatprep.subr.bf16.mxu0 0
      %271 = vmatpush2.bf16.msra.mxu0 0
      %272 = vmatprep.subr.bf16.mxu0 0
      %273 = vmatpush2.bf16.msra.mxu0 0
      %274 = vmatprep.subr.bf16.mxu0 0
      %275 = vmatpush2.bf16.msra.mxu0 0
      %276 = vmatprep.subr.bf16.mxu0 0
      %277 = vmatpush2.bf16.msra.mxu0 0
      %278 = vmatprep.subr.bf16.mxu0 0
      %279 = vmatpush2.bf16.msra.mxu0 0
      %280 = vmatprep.subr.bf16.mxu0 0
      %281 = vmatpush2.bf16.msra.mxu0 0
      %282 = vmatprep.subr.bf16.mxu0 0
      %283 = vmatpush2.bf16.msra.mxu0 0
      %284 = vmatprep.mubr.bf16.mxu0 0
      %285 = vmatmul.mubr.bf16.gmra.mxu0 %v243
      %v286 = vpop.f32.mrf.mxu0
      %v287 = vadd.f32 %v239, %v286
      %v288 = vpop.f32.mrf.mxu0
      %v289 = vadd.f32 %v239, %v288
      %v290 = vpop.f32.mrf.mxu0
      %v291 = vpop.f32.mrf.mxu0
      %292 = vdwg.mxu0
      %v295 = vcombine.low %v287, %v289
      %297 = vst [vmem:[%s225] sm:$0xff] %v295
      %s298 = smul.u32 2, %s19
      %p299 = scmp.lt.s32.totalorder %s18, 1
      %s300 = scalar_select %p299, %s18, 1
      %p301 = scmp.lt.s32.totalorder %s298, 1
      %s302 = scalar_select %p301, %s298, 1
      %s303 = smul.addr %s300, 2
      %s304 = sadd.s32 %s302, %s303
      %s305 = smul.addr %s304, 4
      %s306 = scalar_lea.vmem %s3, %s305
      // Predicated region
      $region33: #{meta_forward.3} parent=31 // pred_check
        %p307 = pneg %p121
      $region34: #{meta_forward.3} parent=31 // pred_check_branch
        %309 = sbr.rel (%p307) target = $region36
      $region35: #{meta_forward.3} parent=31 // pred_region
        %s310 = smul.u32 2, %s19
      $region36: #{meta_forward.3} parent=31 // pred_fallthru
        _
    $region32: #{meta_forward.3} parent=5 // pred_fallthru
      _
    %p311 = scmp.le.s32.totalorder 2, %s9
    // Predicated region
    $region37: #{meta_forward.3} parent=5 // pred_check
      %p312 = pneg %p311
    $region38: #{meta_forward.3} parent=5 // pred_check_branch
      %314 = sbr.rel (%p312) target = $region40
    $region39: #{meta_forward.3} parent=5 // pred_region
      %s315 = ssub.s32 %s9, 2
      // Predicated region
      $region41: #{meta_forward.3} parent=39 // pred_check
        %p316 = pneg %p127
      $region42: #{meta_forward.3} parent=39 // pred_check_branch
        %318 = sbr.rel (%p316) target = $region44
      $region43: #{meta_forward.3} parent=39 // pred_region
        %s319 = smul.u32 2, %s21
        %p320 = scmp.lt.s32.totalorder %s20, 1
        %s321 = scalar_select %p320, %s20, 1
        %p322 = scmp.lt.s32.totalorder %s319, 1
        %s323 = scalar_select %p322, %s319, 1
        %s324 = smul.addr %s321, 2
        %s325 = sadd.s32 %s323, %s324
        %s326 = smul.addr %s325, 4
        %s327 = scalar_lea.vmem %s3, %s326
      $region44: #{meta_forward.3} parent=39 // pred_fallthru
        _
    $region40: #{meta_forward.3} parent=5 // pred_fallthru
      _
  $region6: #{meta_forward.3} parent=0 // loop_footer
    %s13 = sadd.s32 1, %s9
  $region7: #{meta_forward.3} parent=0 // loop_footer_branch
    %8 = sbr.rel target = $region3
  $region8: #{meta_forward.3} parent=0 // loop_exit
    _

// kernel: meta_forward.2
$region0: #{meta_forward.2}
  #allocation0 [shape = 'u32[]', space=smem, size = 0x4, offset = 0x4, fixed_abs, tag = 'smem constant byte address 0x4 - core index']
  #allocation1 [shape = 'u32[144,128]{1,0:T(1,128)}', space=vmem, size = 0x12000, scoped, tag = 'internal scratch']
  #allocation2 [shape = 'f32[2,100]{1,0:T(2,128)}', space=vmem, size = 0x400, scoped, tag = 'scratch operand']
  %s0 = inlined_call_operand.vmem [shape: f32[2,9], index: 0, kind: input, shape index: {}]
  %s1 = inlined_call_operand.vmem [shape: f32[9,100], index: 1, kind: input, shape index: {}]
  %s2 = inlined_call_operand.vmem [shape: f32[1,100], index: 2, kind: input, shape index: {}]
  %s3 = inlined_call_operand.vmem [shape: f32[100,16], index: 3, kind: input, shape index: {}]
  %s4 = inlined_call_operand.vmem [shape: f32[1,16], index: 4, kind: input, shape index: {}]
  %s5 = inlined_call_operand.vmem [shape: f32[1,16], index: 5, kind: input, shape index: {}]
  %s6 = inlined_call_operand.vmem [shape: bf16[2,16], index: 6, kind: output, shape index: {}]
  %s7 = sld [smem:[#allocation0]]
  $region38: #{meta_forward.2} parent=0
    _
  %s9 = ssub.s32 1, %s7
  %s10 = scalar_select 0, %s9, %s7
  // Predicated region
  $region2: #{meta_forward.2} parent=0 // pred_check
    _
  $region3: #{meta_forward.2} parent=0 // pred_check_branch
    %12 = sbr.rel (0) target = $region5
  $region4: #{meta_forward.2} parent=0 // pred_region
    _
  $region5: #{meta_forward.2} parent=0 // pred_fallthru
    _
  // Predicated region
  $region6: #{meta_forward.2} parent=0 // pred_check
    _
  $region7: #{meta_forward.2} parent=0 // pred_check_branch
    %14 = sbr.rel (0) target = $region9
  $region8: #{meta_forward.2} parent=0 // pred_region
    _
  $region9: #{meta_forward.2} parent=0 // pred_fallthru
    _
  // Predicated region
  $region10: #{meta_forward.2} parent=0 // pred_check
    _
  $region11: #{meta_forward.2} parent=0 // pred_check_branch
    %16 = sbr.rel (0) target = $region13
  $region12: #{meta_forward.2} parent=0 // pred_region
    _
  $region13: #{meta_forward.2} parent=0 // pred_fallthru
    _
  // Predicated region
  $region14: #{meta_forward.2} parent=0 // pred_check
    _
  $region15: #{meta_forward.2} parent=0 // pred_check_branch
    %18 = sbr.rel (0) target = $region17
  $region16: #{meta_forward.2} parent=0 // pred_region
    _
  $region17: #{meta_forward.2} parent=0 // pred_fallthru
    _
  // Predicated region
  $region18: #{meta_forward.2} parent=0 // pred_check
    _
  $region19: #{meta_forward.2} parent=0 // pred_check_branch
    %20 = sbr.rel (0) target = $region21
  $region20: #{meta_forward.2} parent=0 // pred_region
    _
  $region21: #{meta_forward.2} parent=0 // pred_fallthru
    _
  // Predicated region
  $region22: #{meta_forward.2} parent=0 // pred_check
    _
  $region23: #{meta_forward.2} parent=0 // pred_check_branch
    %22 = sbr.rel (0) target = $region25
  $region24: #{meta_forward.2} parent=0 // pred_region
    _
  $region25: #{meta_forward.2} parent=0 // pred_fallthru
    _
  %p23 = scmp.eq.s32.totalorder 0, 0
  // Predicated region
  $region26: #{meta_forward.2} parent=0 // pred_check
    %p24 = pneg %p23
  $region27: #{meta_forward.2} parent=0 // pred_check_branch
    %26 = sbr.rel (%p24) target = $region29
  $region28: #{meta_forward.2} parent=0 // pred_region
    %v27 = vld [vmem:[%s0] sm:$0x3]
    %v28 = vld [vmem:[%s1] sm:$0xff]
    %v29 = vld [vmem:[%s1 + $0x8] sm:$0x1]
    %v30 = vld [vmem:[%s2] sm:$0x1]
    %v32 = vlaneseq
    %v33 = vshrl.u32 %v32, 7
    %v34 = vsub.s32 0, %v33
    %v35 = vrot.slane %v30, %v34
    %vm37 = vcmask 72704
    %v39 = vsel %vm37, %v27, 0
    %vm41 = vcmask 1040384
    %v43 = vsel %vm41, %v29, 0
    %45 = vmatprep.subr.mxu0 0.0
    %46 = vmatpush1.msra.mxu0 0.0
    %47 = vmatprep.subr.mxu0 0.0
    %48 = vmatpush1.msra.mxu0 0.0
    %49 = vmatprep.subr.mxu0 0.0
    %50 = vmatpush1.msra.mxu0 0.0
    %51 = vmatprep.subr.mxu0 0.0
    %52 = vmatpush1.msra.mxu0 0.0
    %53 = vmatprep.subr.mxu0 0.0
    %54 = vmatpush1.msra.mxu0 0.0
    %55 = vmatprep.subr.mxu0 0.0
    %56 = vmatpush1.msra.mxu0 0.0
    %57 = vmatprep.subr.mxu0 0.0
    %58 = vmatpush1.msra.mxu0 0.0
    %59 = vmatprep.subr.mxu0 0.0
    %60 = vmatpush1.msra.mxu0 0.0
    %61 = vmatprep.subr.mxu0 0.0
    %62 = vmatpush1.msra.mxu0 0.0
    %63 = vmatprep.subr.mxu0 0.0
    %64 = vmatpush1.msra.mxu0 0.0
    %65 = vmatprep.subr.mxu0 0.0
    %66 = vmatpush1.msra.mxu0 0.0
    %67 = vmatprep.subr.mxu0 0.0
    %68 = vmatpush1.msra.mxu0 0.0
    %69 = vmatprep.subr.mxu0 0.0
    %70 = vmatpush1.msra.mxu0 0.0
    %71 = vmatprep.subr.mxu0 0.0
    %72 = vmatpush1.msra.mxu0 0.0
    %73 = vmatprep.subr.mxu0 0.0
    %74 = vmatpush1.msra.mxu0 %v43
    %75 = vmatprep.subr.mxu0 0.0
    %76 = vmatpush1.msra.mxu0 %v28
    %77 = vmatprep.subr.mxu0 0.0
    %78 = vmatpush2.msra.mxu0 0.0
    %79 = vmatprep.subr.mxu0 0.0
    %80 = vmatpush2.msra.mxu0 0.0
    %81 = vmatprep.subr.mxu0 0.0
    %82 = vmatpush2.msra.mxu0 0.0
    %83 = vmatprep.subr.mxu0 0.0
    %84 = vmatpush2.msra.mxu0 0.0
    %85 = vmatprep.subr.mxu0 0.0
    %86 = vmatpush2.msra.mxu0 0.0
    %87 = vmatprep.subr.mxu0 0.0
    %88 = vmatpush2.msra.mxu0 0.0
    %89 = vmatprep.subr.mxu0 0.0
    %90 = vmatpush2.msra.mxu0 0.0
    %91 = vmatprep.subr.mxu0 0.0
    %92 = vmatpush2.msra.mxu0 0.0
    %93 = vmatprep.subr.mxu0 0.0
    %94 = vmatpush2.msra.mxu0 0.0
    %95 = vmatprep.subr.mxu0 0.0
    %96 = vmatpush2.msra.mxu0 0.0
    %97 = vmatprep.subr.mxu0 0.0
    %98 = vmatpush2.msra.mxu0 0.0
    %99 = vmatprep.subr.mxu0 0.0
    %100 = vmatpush2.msra.mxu0 0.0
    %101 = vmatprep.subr.mxu0 0.0
    %102 = vmatpush2.msra.mxu0 0.0
    %103 = vmatprep.subr.mxu0 0.0
    %104 = vmatpush2.msra.mxu0 0.0
    %105 = vmatprep.subr.mxu0 0.0
    %106 = vmatpush2.msra.mxu0 0.0
    %107 = vmatprep.subr.mxu0 0.0
    %108 = vmatpush2.msra.mxu0 0.0
    %109 = vmatprep.mubr.f32.mxu0 0.0
    %110 = vmatmul.mubr.f32.gmra.mxu0 %v39
    %v111 = vpop.f32.mrf.mxu0
    %v112 = vadd.f32 %v35, %v111
    %v113 = vpop.f32.mrf.mxu0
    %114 = vdwg.mxu0
    %v115 = vmax.f32 %v112, 0.0
    %vm116 = vcmask 812032
    %117 = vst.msk [vmem:[#allocation2] sm:$0x3] %vm116, %v115
  $region29: #{meta_forward.2} parent=0 // pred_fallthru
    _
  %v118 = vld [vmem:[#allocation2] sm:$0x3]
  %v119 = vld [vmem:[%s3] sm:$0xff]
  %v120 = vld [vmem:[%s3 + $0x8] sm:$0xff]
  %v121 = vld [vmem:[%s3 + $0x10] sm:$0xff]
  %v122 = vld [vmem:[%s3 + $0x18] sm:$0xff]
  %v123 = vld [vmem:[%s3 + $0x20] sm:$0xff]
  %v124 = vld [vmem:[%s3 + $0x28] sm:$0xff]
  %v125 = vld [vmem:[%s3 + $0x30] sm:$0xff]
  %v126 = vld [vmem:[%s3 + $0x38] sm:$0xff]
  %v127 = vld [vmem:[%s3 + $0x40] sm:$0xff]
  %v128 = vld [vmem:[%s3 + $0x48] sm:$0xff]
  %v129 = vld [vmem:[%s3 + $0x50] sm:$0xff]
  %v130 = vld [vmem:[%s3 + $0x58] sm:$0xff]
  %v131 = vld [vmem:[%s3 + $0x60] sm:$0xf]
  %v132 = vld [vmem:[%s4] sm:$0x1]
  %v134 = vlaneseq
  %v135 = vshrl.u32 %v134, 7
  %v136 = vsub.s32 0, %v135
  %v137 = vrot.slane %v132, %v136
  %vm139 = vcmask 818176
  %v141 = vsel %vm139, %v118, 0
  %vm143 = vcmask 1043456
  %v145 = vsel %vm143, %v131, 0
  %147 = vmatprep.subr.mxu0 0.0
  %148 = vmatpush1.msra.mxu0 0.0
  %149 = vmatprep.subr.mxu0 0.0
  %150 = vmatpush1.msra.mxu0 0.0
  %151 = vmatprep.subr.mxu0 0.0
  %152 = vmatpush1.msra.mxu0 0.0
  %153 = vmatprep.subr.mxu0 0.0
  %154 = vmatpush1.msra.mxu0 %v145
  %155 = vmatprep.subr.mxu0 0.0
  %156 = vmatpush1.msra.mxu0 %v130
  %157 = vmatprep.subr.mxu0 0.0
  %158 = vmatpush1.msra.mxu0 %v129
  %159 = vmatprep.subr.mxu0 0.0
  %160 = vmatpush1.msra.mxu0 %v128
  %161 = vmatprep.subr.mxu0 0.0
  %162 = vmatpush1.msra.mxu0 %v127
  %163 = vmatprep.subr.mxu0 0.0
  %164 = vmatpush1.msra.mxu0 %v126
  %165 = vmatprep.subr.mxu0 0.0
  %166 = vmatpush1.msra.mxu0 %v125
  %167 = vmatprep.subr.mxu0 0.0
  %168 = vmatpush1.msra.mxu0 %v124
  %169 = vmatprep.subr.mxu0 0.0
  %170 = vmatpush1.msra.mxu0 %v123
  %171 = vmatprep.subr.mxu0 0.0
  %172 = vmatpush1.msra.mxu0 %v122
  %173 = vmatprep.subr.mxu0 0.0
  %174 = vmatpush1.msra.mxu0 %v121
  %175 = vmatprep.subr.mxu0 0.0
  %176 = vmatpush1.msra.mxu0 %v120
  %177 = vmatprep.subr.mxu0 0.0
  %178 = vmatpush1.msra.mxu0 %v119
  %179 = vmatprep.subr.mxu0 0.0
  %180 = vmatpush2.msra.mxu0 0.0
  %181 = vmatprep.subr.mxu0 0.0
  %182 = vmatpush2.msra.mxu0 0.0
  %183 = vmatprep.subr.mxu0 0.0
  %184 = vmatpush2.msra.mxu0 0.0
  %185 = vmatprep.subr.mxu0 0.0
  %186 = vmatpush2.msra.mxu0 0.0
  %187 = vmatprep.subr.mxu0 0.0
  %188 = vmatpush2.msra.mxu0 0.0
  %189 = vmatprep.subr.mxu0 0.0
  %190 = vmatpush2.msra.mxu0 0.0
  %191 = vmatprep.subr.mxu0 0.0
  %192 = vmatpush2.msra.mxu0 0.0
  %193 = vmatprep.subr.mxu0 0.0
  %194 = vmatpush2.msra.mxu0 0.0
  %195 = vmatprep.subr.mxu0 0.0
  %196 = vmatpush2.msra.mxu0 0.0
  %197 = vmatprep.subr.mxu0 0.0
  %198 = vmatpush2.msra.mxu0 0.0
  %199 = vmatprep.subr.mxu0 0.0
  %200 = vmatpush2.msra.mxu0 0.0
  %201 = vmatprep.subr.mxu0 0.0
  %202 = vmatpush2.msra.mxu0 0.0
  %203 = vmatprep.subr.mxu0 0.0
  %204 = vmatpush2.msra.mxu0 0.0
  %205 = vmatprep.subr.mxu0 0.0
  %206 = vmatpush2.msra.mxu0 0.0
  %207 = vmatprep.subr.mxu0 0.0
  %208 = vmatpush2.msra.mxu0 0.0
  %209 = vmatprep.subr.mxu0 0.0
  %210 = vmatpush2.msra.mxu0 0.0
  %211 = vmatprep.mubr.f32.mxu0 0.0
  %212 = vmatmul.mubr.f32.gmra.mxu0 %v141
  %v213 = vpop.f32.mrf.mxu0
  %v214 = vadd.f32 %v137, %v213
  %v215 = vpop.f32.mrf.mxu0
  %216 = vdwg.mxu0
  %v217 = vld [vmem:[%s5] sm:$0x1]
  %v219 = vlaneseq
  %v220 = vshrl.u32 %v219, 7
  %v221 = vsub.s32 0, %v220
  %v222 = vrot.slane %v217, %v221
  %v224 = vadd.f32 %v214, %v222
  %v225 = vpack.c.bf16 %v224, %v224
  %vm226 = vcmask 122880
  %227 = vst.msk [vmem:[%s6] sm:$0x1] %vm226, %v225
  // Predicated region
  $region30: #{meta_forward.2} parent=0 // pred_check
    _
  $region31: #{meta_forward.2} parent=0 // pred_check_branch
    %229 = sbr.rel (0) target = $region33
  $region32: #{meta_forward.2} parent=0 // pred_region
    _
  $region33: #{meta_forward.2} parent=0 // pred_fallthru
    _
  // Predicated region
  $region34: #{meta_forward.2} parent=0 // pred_check
    _
  $region35: #{meta_forward.2} parent=0 // pred_check_branch
    %231 = sbr.rel (0) target = $region37
  $region36: #{meta_forward.2} parent=0 // pred_region
    _
  $region37: #{meta_forward.2} parent=0 // pred_fallthru
    _

</llo_original>
